<compile_context>
chip_gen: v6e
topology: v6e:2x2x1
jax: 0.10.0
libtpu: 0.0.40
codegen_flags: <defaults>
</compile_context>

<pallas_src>
import functools
import math

import jax
import jax.numpy as jnp
from jax import lax
from jax.experimental import pallas as pl
from jax.experimental.pallas import tpu as pltpu


# ---------------------------------------------------------------------------
# Kernel 1: time-parallel fused input projection  gi = x @ W_ih + bias
# ---------------------------------------------------------------------------
def _input_proj_kernel(x_ref, w_ref, b_ref, gi_ref):
    # x_ref: (tm, D) bf16, w_ref: (D, 3H) bf16, b_ref: (1, 3H) f32
    # gi_ref: (tm, 3H) f32
    gi_ref[...] = (
        jnp.dot(x_ref[...], w_ref[...], preferred_element_type=jnp.float32)
        + b_ref[...]
    )


def gru_input_projection(x_2d, w_ih, bias):
    """x_2d: (M, D) bf16, w_ih: (D, 3H) bf16, bias: (1, 3H) f32 -> (M, 3H) f32."""
    M, D = x_2d.shape
    G = w_ih.shape[-1]  # 3H
    tm = M if M <= 512 else 512  # full-dim block (always legal) or multiple of 8
    grid_m = pl.cdiv(M, tm)
    return pl.pallas_call(
        _input_proj_kernel,
        out_shape=jax.ShapeDtypeStruct((M, G), jnp.float32),
        grid_spec=pltpu.PrefetchScalarGridSpec(
            num_scalar_prefetch=0,
            grid=(grid_m,),
            in_specs=[
                pl.BlockSpec((tm, D), lambda m: (m, 0)),
                pl.BlockSpec((D, G), lambda m: (0, 0)),
                pl.BlockSpec((1, G), lambda m: (0, 0)),
            ],
            out_specs=pl.BlockSpec((tm, G), lambda m: (m, 0)),
        ),
        compiler_params=pltpu.CompilerParams(
            dimension_semantics=("parallel",)),
    )(x_2d, w_ih, bias)


# ---------------------------------------------------------------------------
# Kernel 2: recurrence over time (chunked), one fused (H, 3H) matmul per step
# ---------------------------------------------------------------------------
def _gru_recurrent_kernel(gi_ref, whh_ref, bhn_ref, out_ref, h_scratch,
                          *, hidden, chunk):
    """One GRU layer recurrence. Grid axis 0 = time chunk (sequential).

    gi_ref  : (Tc, B, 3H) f32  precomputed x W_ih + b_ih (+ b_hr, b_hz folded)
    whh_ref : (H, 3H)     bf16 fused hidden->hidden weights (r | z | n)
    bhn_ref : (1, H)      f32  hidden bias of the n gate (must stay inside r*())
    out_ref : (Tc, B, H)  f32  outputs for this chunk
    h_scratch: (B, H)     f32  carried hidden state across chunks
    """
    c = pl.program_id(0)
    H = hidden

    @pl.when(c == 0)
    def _():
        h_scratch[...] = jnp.zeros_like(h_scratch)

    w_hh = whh_ref[...]     # (H, 3H) bf16, grid-invariant
    b_hn = bhn_ref[...]     # (1, H)  f32

    def step(i, h):
        gi = gi_ref[i]                                   # (B, 3H) f32
        gh = jnp.dot(h.astype(w_hh.dtype), w_hh,
                     preferred_element_type=jnp.float32)  # (B, 3H) f32
        s = gi + gh
        r = jax.nn.sigmoid(s[:, :H])
        z = jax.nn.sigmoid(s[:, H:2 * H])
        n = jnp.tanh(gi[:, 2 * H:] + r * (gh[:, 2 * H:] + b_hn))
        h_new = (1.0 - z) * n + z * h
        out_ref[i] = h_new.astype(out_ref.dtype)
        return h_new

    h_final = lax.fori_loop(0, chunk, step, h_scratch[...], unroll=True)
    h_scratch[...] = h_final


def gru_recurrence(gi_tbg, w_hh, b_hn, *, hidden, time_chunk):
    """gi_tbg: (T, B, 3H) f32, w_hh: (H, 3H) bf16, b_hn: (1, H) f32 -> (T, B, H) f32."""
    T, B, G = gi_tbg.shape
    H = hidden
    n_chunks = T // time_chunk
    kernel = functools.partial(_gru_recurrent_kernel, hidden=H, chunk=time_chunk)
    return pl.pallas_call(
        kernel,
        out_shape=jax.ShapeDtypeStruct((T, B, H), jnp.float32),
        grid_spec=pltpu.PrefetchScalarGridSpec(
            num_scalar_prefetch=0,
            grid=(n_chunks,),
            in_specs=[
                pl.BlockSpec((time_chunk, B, G), lambda c: (c, 0, 0)),
                pl.BlockSpec((H, G), lambda c: (0, 0)),
                pl.BlockSpec((1, H), lambda c: (0, 0)),
            ],
            out_specs=pl.BlockSpec((time_chunk, B, H), lambda c: (c, 0, 0)),
            scratch_shapes=[pltpu.VMEM((B, H), jnp.float32)],
        ),
        compiler_params=pltpu.CompilerParams(
            dimension_semantics=("arbitrary",)),  # recurrence: sequential axis
    )(gi_tbg, w_hh, b_hn)


# ---------------------------------------------------------------------------
# Parameters / forward / reference
# ---------------------------------------------------------------------------
def init_gru_params(key, dim_in, dim_out, num_layers):
    """uniform(-1/sqrt(H), 1/sqrt(H)) init (mirrors nn.GRU), gate-fused layout:
       w_ih: (D_layer, 3H), w_hh: (H, 3H), b_ih/b_hh: (1, 3H); columns r|z|n."""
    H = dim_out
    k = 1.0 / math.sqrt(H)
    params = []
    for layer in range(num_layers):
        d = dim_in if layer == 0 else H
        key, k1, k2, k3, k4 = jax.random.split(key, 5)
        w_ih = jax.random.uniform(k1, (d, 3 * H), jnp.float32, -k, k)
        w_hh = jax.random.uniform(k2, (H, 3 * H), jnp.float32, -k, k)
        b_ih = jax.random.uniform(k3, (1, 3 * H), jnp.float32, -k, k)
        b_hh = jax.random.uniform(k4, (1, 3 * H), jnp.float32, -k, k)
        params.append((w_ih, w_hh, b_ih, b_hh))
    return params


def _pick_time_chunk(T, max_chunk=32):
    """Largest divisor of T that is <= max_chunk (so chunks tile T exactly)."""
    tc = 1
    for c in range(1, min(T, max_chunk) + 1):
        if T % c == 0:
            tc = c
    return tc


@jax.jit
def gru_rnn_forward(x_btd, params):
    """Equivalent of GRURNN.forward (nn.GRU, batch_first=True).

    x_btd: (B, T, dim_in).  Returns (output (B, T, H), h_n (num_layers, B, H)).
    """
    B, T, _ = x_btd.shape
    x = jnp.transpose(x_btd, (1, 0, 2))  # time-major (T, B, D)
    tc = _pick_time_chunk(T)
    h_ns = []
    for (w_ih, w_hh, b_ih, b_hh) in params:
        D = x.shape[-1]
        H = w_hh.shape[0]
        # Fold b_hr, b_hz into the (time-parallel) input projection bias; only
        # the n-gate hidden bias must stay inside the recurrence.
        b_fold = b_ih + jnp.concatenate(
            [b_hh[:, :2 * H], jnp.zeros((1, H), jnp.float32)], axis=-1)
        b_hn = b_hh[:, 2 * H:]
        gi = gru_input_projection(
            x.reshape(T * B, D).astype(jnp.bfloat16),
            w_ih.astype(jnp.bfloat16),
            b_fold,
        ).reshape(T, B, 3 * H)
        x = gru_recurrence(gi, w_hh.astype(jnp.bfloat16), b_hn,
                           hidden=H, time_chunk=tc)
        h_ns.append(x[-1])                      # final hidden state of layer
    output = jnp.transpose(x, (1, 0, 2))        # back to (B, T, H)
    h_n = jnp.stack(h_ns, axis=0)               # (num_layers, B, H)
    return output, h_n


def gru_rnn_reference(x_btd, params, matmul_dtype=jnp.float32):
    """Pure-JAX reference (lax.scan). matmul_dtype=bf16 mirrors the kernel's
    mixed precision (bf16 MXU operands, f32 accumulation & gate math)."""
    x = jnp.transpose(x_btd, (1, 0, 2))
    h_ns = []
    for (w_ih, w_hh, b_ih, b_hh) in params:
        B = x.shape[1]
        H = w_hh.shape[0]
        h0 = jnp.zeros((B, H), jnp.float32)
        wi = w_ih.astype(matmul_dtype)
        wh = w_hh.astype(matmul_dtype)

        def step(h, x_t):
            gi = jnp.dot(x_t.astype(matmul_dtype), wi,
                         preferred_element_type=jnp.float32) + b_ih
            gh = jnp.dot(h.astype(matmul_dtype), wh,
                         preferred_element_type=jnp.float32) + b_hh
            r = jax.nn.sigmoid(gi[:, :H] + gh[:, :H])
            z = jax.nn.sigmoid(gi[:, H:2 * H] + gh[:, H:2 * H])
            n = jnp.tanh(gi[:, 2 * H:] + r * gh[:, 2 * H:])
            h_new = (1.0 - z) * n + z * h
            return h_new, h_new

        h_last, outs = lax.scan(step, h0, x)
        x = outs
        h_ns.append(h_last)
    return jnp.transpose(x, (1, 0, 2)), jnp.stack(h_ns, axis=0)


if __name__ == "__main__":
    # Small shapes consistent with the module: GRU(dim_in, dim_out, num_layers)
    B, T, DIM_IN, DIM_OUT, NUM_LAYERS = 2, 8, 4, 32, 2

    key = jax.random.PRNGKey(0)
    key_x, key_p = jax.random.split(key)
    x = jax.random.normal(key_x, (B, T, DIM_IN), jnp.float32)
    params = init_gru_params(key_p, DIM_IN, DIM_OUT, NUM_LAYERS)

    output, h_n = gru_rnn_forward(x, params)
    output = jax.block_until_ready(output)
    h_n = jax.block_until_ready(h_n)

    assert output.shape == (B, T, DIM_OUT)
    assert h_n.shape == (NUM_LAYERS, B, DIM_OUT)

    # Exact-precision check vs. a reference that mirrors the kernel's mixed
    # precision (bf16 matmul operands, f32 accumulation / gate math).
    ref_out, ref_hn = gru_rnn_reference(x, params, matmul_dtype=jnp.bfloat16)
    assert jnp.allclose(output, ref_out, atol=2e-3, rtol=2e-3)
    assert jnp.allclose(h_n, ref_hn, atol=2e-3, rtol=2e-3)

    # Semantic sanity check vs. the full-f32 GRU (tolerates bf16 weight rounding).
    f32_out, f32_hn = gru_rnn_reference(x, params, matmul_dtype=jnp.float32)
    assert jnp.allclose(output, f32_out, atol=3e-2, rtol=3e-2)
    assert jnp.allclose(h_n, f32_hn, atol=3e-2, rtol=3e-2)

    print("KERNEL_OK")
</pallas_src>

<mosaic_0001>
module attributes {stable_mosaic.version = 11 : i64} {
  func.func @_input_proj_kernel(%arg0: i32, %arg1: memref<16x4xbf16, #tpu.memory_space<vmem>>, %arg2: memref<4x96xbf16, #tpu.memory_space<vmem>>, %arg3: memref<1x96xf32, #tpu.memory_space<vmem>>, %arg4: memref<16x96xf32, #tpu.memory_space<vmem>>) attributes {dimension_semantics = [#tpu.dimension_semantics<parallel>], iteration_bounds = array<i64: 1>, scalar_prefetch = 0 : i64, scratch_operands = 0 : i64, tpu.core_type = #tpu.core_type<tc>, window_params = [{transform_indices = @transform_0, window_bounds = array<i64: 16, 4>}, {pipeline_mode = #tpu.pipeline_mode<synchronous>, transform_indices = @transform_1, window_bounds = array<i64: 4, 96>}, {pipeline_mode = #tpu.pipeline_mode<synchronous>, transform_indices = @transform_2, window_bounds = array<i64: 1, 96>}, {transform_indices = @transform_3, window_bounds = array<i64: 16, 96>}]} {
    %c0 = arith.constant 0 : index
    %c0_0 = arith.constant 0 : index
    %0 = vector.load %arg1[%c0, %c0_0] : memref<16x4xbf16, #tpu.memory_space<vmem>>, vector<16x4xbf16>
    %c0_1 = arith.constant 0 : index
    %c0_2 = arith.constant 0 : index
    %1 = vector.load %arg2[%c0_1, %c0_2] : memref<4x96xbf16, #tpu.memory_space<vmem>>, vector<4x96xbf16>
    %cst = arith.constant dense<0.000000e+00> : vector<16x96xf32>
    %2 = tpu.matmul %0, %1, %cst {dimension_numbers = #tpu.dot_dimension_numbers<[1], [0], [0], [1], [0, 0, 1, 1], [], []>} : vector<16x4xbf16>, vector<4x96xbf16>, vector<16x96xf32> -> vector<16x96xf32>
    %c0_3 = arith.constant 0 : index
    %c0_4 = arith.constant 0 : index
    %3 = vector.load %arg3[%c0_3, %c0_4] : memref<1x96xf32, #tpu.memory_space<vmem>>, vector<1x96xf32>
    %4 = vector.broadcast %3 : vector<1x96xf32> to vector<16x96xf32>
    %5 = arith.addf %2, %4 : vector<16x96xf32>
    %c0_5 = arith.constant 0 : index
    %c0_6 = arith.constant 0 : index
    %6 = vector.load %arg4[%c0_5, %c0_6] : memref<16x96xf32, #tpu.memory_space<vmem>>, vector<16x96xf32>
    tpu.vector_store %arg4[%c0_5, %c0_6], %5 {strides = array<i32>} : memref<16x96xf32, #tpu.memory_space<vmem>>, vector<16x96xf32>,
    return
  }
  func.func @transform_0(%arg0: i32) -> (i32, i32) {
    %c0_i32 = arith.constant 0 : i32
    %c0_i32_0 = arith.constant 0 : i32
    return %arg0, %c0_i32 : i32, i32
  }
  func.func @transform_1(%arg0: i32) -> (i32, i32) {
    %c0_i32 = arith.constant 0 : i32
    %c0_i32_0 = arith.constant 0 : i32
    %c0_i32_1 = arith.constant 0 : i32
    return %c0_i32, %c0_i32_0 : i32, i32
  }
  func.func @transform_2(%arg0: i32) -> (i32, i32) {
    %c0_i32 = arith.constant 0 : i32
    %c0_i32_0 = arith.constant 0 : i32
    %c0_i32_1 = arith.constant 0 : i32
    return %c0_i32, %c0_i32_0 : i32, i32
  }
  func.func @transform_3(%arg0: i32) -> (i32, i32) {
    %c0_i32 = arith.constant 0 : i32
    %c0_i32_0 = arith.constant 0 : i32
    return %arg0, %c0_i32 : i32, i32
  }
}

module attributes {stable_mosaic.version = 11 : i64} {
  func.func @_input_proj_kernel(%arg0: i32, %arg1: memref<16x32xbf16, #tpu.memory_space<vmem>>, %arg2: memref<32x96xbf16, #tpu.memory_space<vmem>>, %arg3: memref<1x96xf32, #tpu.memory_space<vmem>>, %arg4: memref<16x96xf32, #tpu.memory_space<vmem>>) attributes {dimension_semantics = [#tpu.dimension_semantics<parallel>], iteration_bounds = array<i64: 1>, scalar_prefetch = 0 : i64, scratch_operands = 0 : i64, tpu.core_type = #tpu.core_type<tc>, window_params = [{transform_indices = @transform_0, window_bounds = array<i64: 16, 32>}, {pipeline_mode = #tpu.pipeline_mode<synchronous>, transform_indices = @transform_1, window_bounds = array<i64: 32, 96>}, {pipeline_mode = #tpu.pipeline_mode<synchronous>, transform_indices = @transform_2, window_bounds = array<i64: 1, 96>}, {transform_indices = @transform_3, window_bounds = array<i64: 16, 96>}]} {
    %c0 = arith.constant 0 : index
    %c0_0 = arith.constant 0 : index
    %0 = vector.load %arg1[%c0, %c0_0] : memref<16x32xbf16, #tpu.memory_space<vmem>>, vector<16x32xbf16>
    %c0_1 = arith.constant 0 : index
    %c0_2 = arith.constant 0 : index
    %1 = vector.load %arg2[%c0_1, %c0_2] : memref<32x96xbf16, #tpu.memory_space<vmem>>, vector<32x96xbf16>
    %cst = arith.constant dense<0.000000e+00> : vector<16x96xf32>
    %2 = tpu.matmul %0, %1, %cst {dimension_numbers = #tpu.dot_dimension_numbers<[1], [0], [0], [1], [0, 0, 1, 1], [], []>} : vector<16x32xbf16>, vector<32x96xbf16>, vector<16x96xf32> -> vector<16x96xf32>
    %c0_3 = arith.constant 0 : index
    %c0_4 = arith.constant 0 : index
    %3 = vector.load %arg3[%c0_3, %c0_4] : memref<1x96xf32, #tpu.memory_space<vmem>>, vector<1x96xf32>
    %4 = vector.broadcast %3 : vector<1x96xf32> to vector<16x96xf32>
    %5 = arith.addf %2, %4 : vector<16x96xf32>
    %c0_5 = arith.constant 0 : index
    %c0_6 = arith.constant 0 : index
    %6 = vector.load %arg4[%c0_5, %c0_6] : memref<16x96xf32, #tpu.memory_space<vmem>>, vector<16x96xf32>
    tpu.vector_store %arg4[%c0_5, %c0_6], %5 {strides = array<i32>} : memref<16x96xf32, #tpu.memory_space<vmem>>, vector<16x96xf32>,
    return
  }
  func.func @transform_0(%arg0: i32) -> (i32, i32) {
    %c0_i32 = arith.constant 0 : i32
    %c0_i32_0 = arith.constant 0 : i32
    return %arg0, %c0_i32 : i32, i32
  }
  func.func @transform_1(%arg0: i32) -> (i32, i32) {
    %c0_i32 = arith.constant 0 : i32
    %c0_i32_0 = arith.constant 0 : i32
    %c0_i32_1 = arith.constant 0 : i32
    return %c0_i32, %c0_i32_0 : i32, i32
  }
  func.func @transform_2(%arg0: i32) -> (i32, i32) {
    %c0_i32 = arith.constant 0 : i32
    %c0_i32_0 = arith.constant 0 : i32
    %c0_i32_1 = arith.constant 0 : i32
    return %c0_i32, %c0_i32_0 : i32, i32
  }
  func.func @transform_3(%arg0: i32) -> (i32, i32) {
    %c0_i32 = arith.constant 0 : i32
    %c0_i32_0 = arith.constant 0 : i32
    return %arg0, %c0_i32 : i32, i32
  }
}

module attributes {stable_mosaic.version = 11 : i64} {
  func.func @_gru_recurrent_kernel(%arg0: i32, %arg1: memref<8x2x96xf32, #tpu.memory_space<vmem>>, %arg2: memref<32x96xbf16, #tpu.memory_space<vmem>>, %arg3: memref<1x32xf32, #tpu.memory_space<vmem>>, %arg4: memref<8x2x32xf32, #tpu.memory_space<vmem>>, %arg5: memref<2x32xf32, #tpu.memory_space<vmem>>) attributes {dimension_semantics = [#tpu.dimension_semantics<arbitrary>], iteration_bounds = array<i64: 1>, scalar_prefetch = 0 : i64, scratch_operands = 1 : i64, tpu.core_type = #tpu.core_type<tc>, window_params = [{transform_indices = @transform_0, window_bounds = array<i64: 8, 2, 96>}, {pipeline_mode = #tpu.pipeline_mode<synchronous>, transform_indices = @transform_1, window_bounds = array<i64: 32, 96>}, {pipeline_mode = #tpu.pipeline_mode<synchronous>, transform_indices = @transform_2, window_bounds = array<i64: 1, 32>}, {transform_indices = @transform_3, window_bounds = array<i64: 8, 2, 32>}]} {
    %c0_i32 = arith.constant 0 : i32
    %0 = arith.cmpi eq, %arg0, %c0_i32 : i32
    %1 = arith.extui %0 : i1 to i32
    %c0_i32_0 = arith.constant 0 : i32
    %2 = arith.cmpi ne, %1, %c0_i32_0 : i32
    scf.if %2 {
      %cst_72 = arith.constant 0.000000e+00 : f32
      %279 = vector.broadcast %cst_72 : f32 to vector<2x32xf32>
      %c0_73 = arith.constant 0 : index
      %c0_74 = arith.constant 0 : index
      %280 = vector.load %arg5[%c0_73, %c0_74] : memref<2x32xf32, #tpu.memory_space<vmem>>, vector<2x32xf32>
      tpu.vector_store %arg5[%c0_73, %c0_74], %279 {strides = array<i32>} : memref<2x32xf32, #tpu.memory_space<vmem>>, vector<2x32xf32>,
    } else {
    }
    %c0 = arith.constant 0 : index
    %c0_1 = arith.constant 0 : index
    %3 = vector.load %arg2[%c0, %c0_1] : memref<32x96xbf16, #tpu.memory_space<vmem>>, vector<32x96xbf16>
    %c0_2 = arith.constant 0 : index
    %c0_3 = arith.constant 0 : index
    %4 = vector.load %arg3[%c0_2, %c0_3] : memref<1x32xf32, #tpu.memory_space<vmem>>, vector<1x32xf32>
    %c0_4 = arith.constant 0 : index
    %c0_5 = arith.constant 0 : index
    %5 = vector.load %arg5[%c0_4, %c0_5] : memref<2x32xf32, #tpu.memory_space<vmem>>, vector<2x32xf32>
    %c0_i32_6 = arith.constant 0 : i32
    %6 = arith.index_cast %c0_i32_6 : i32 to index
    %c0_7 = arith.constant 0 : index
    %c0_8 = arith.constant 0 : index
    %7 = vector.load %arg1[%6, %c0_7, %c0_8] : memref<8x2x96xf32, #tpu.memory_space<vmem>>, vector<1x2x96xf32>
    %8 = vector.shape_cast %7 : vector<1x2x96xf32> to vector<2x96xf32>
    %9 = arith.truncf %5 : vector<2x32xf32> to vector<2x32xbf16>
    %cst = arith.constant dense<0.000000e+00> : vector<2x96xf32>
    %10 = tpu.matmul %9, %3, %cst {dimension_numbers = #tpu.dot_dimension_numbers<[1], [0], [0], [1], [0, 0, 1, 1], [], []>} : vector<2x32xbf16>, vector<32x96xbf16>, vector<2x96xf32> -> vector<2x96xf32>
    %11 = arith.addf %8, %10 : vector<2x96xf32>
    %12 = vector.extract_strided_slice %11 {offsets = [0, 0], sizes = [2, 32], strides = [1, 1]} : vector<2x96xf32> to vector<2x32xf32>
    %13 = arith.negf %12 : vector<2x32xf32>
    %14 = math.exp %13 : vector<2x32xf32>
    %cst_9 = arith.constant 1.000000e+00 : f32
    %15 = vector.broadcast %cst_9 : f32 to vector<2x32xf32>
    %16 = arith.addf %15, %14 : vector<2x32xf32>
    %17 = arith.divf %15, %16 : vector<2x32xf32>
    %18 = vector.extract_strided_slice %11 {offsets = [0, 32], sizes = [2, 32], strides = [1, 1]} : vector<2x96xf32> to vector<2x32xf32>
    %19 = arith.negf %18 : vector<2x32xf32>
    %20 = math.exp %19 : vector<2x32xf32>
    %cst_10 = arith.constant 1.000000e+00 : f32
    %21 = vector.broadcast %cst_10 : f32 to vector<2x32xf32>
    %22 = arith.addf %21, %20 : vector<2x32xf32>
    %23 = arith.divf %21, %22 : vector<2x32xf32>
    %24 = vector.extract_strided_slice %8 {offsets = [0, 64], sizes = [2, 32], strides = [1, 1]} : vector<2x96xf32> to vector<2x32xf32>
    %25 = vector.extract_strided_slice %10 {offsets = [0, 64], sizes = [2, 32], strides = [1, 1]} : vector<2x96xf32> to vector<2x32xf32>
    %26 = vector.broadcast %4 : vector<1x32xf32> to vector<2x32xf32>
    %27 = arith.addf %25, %26 : vector<2x32xf32>
    %28 = arith.mulf %17, %27 : vector<2x32xf32>
    %29 = arith.addf %24, %28 : vector<2x32xf32>
    %30 = math.tanh %29 : vector<2x32xf32>
    %cst_11 = arith.constant 1.000000e+00 : f32
    %31 = vector.broadcast %cst_11 : f32 to vector<2x32xf32>
    %32 = arith.subf %31, %23 : vector<2x32xf32>
    %33 = arith.mulf %32, %30 : vector<2x32xf32>
    %34 = arith.mulf %23, %5 : vector<2x32xf32>
    %35 = arith.addf %33, %34 : vector<2x32xf32>
    %36 = arith.index_cast %c0_i32_6 : i32 to index
    %c0_12 = arith.constant 0 : index
    %c0_13 = arith.constant 0 : index
    %37 = vector.load %arg4[%36, %c0_12, %c0_13] : memref<8x2x32xf32, #tpu.memory_space<vmem>>, vector<1x2x32xf32>
    %38 = vector.shape_cast %37 : vector<1x2x32xf32> to vector<2x32xf32>
    %39 = vector.shape_cast %35 : vector<2x32xf32> to vector<1x2x32xf32>
    tpu.vector_store %arg4[%36, %c0_12, %c0_13], %39 {strides = array<i32>} : memref<8x2x32xf32, #tpu.memory_space<vmem>>, vector<1x2x32xf32>,
    %c1_i32 = arith.constant 1 : i32
    %40 = arith.index_cast %c1_i32 : i32 to index
    %c0_14 = arith.constant 0 : index
    %c0_15 = arith.constant 0 : index
    %41 = vector.load %arg1[%40, %c0_14, %c0_15] : memref<8x2x96xf32, #tpu.memory_space<vmem>>, vector<1x2x96xf32>
    %42 = vector.shape_cast %41 : vector<1x2x96xf32> to vector<2x96xf32>
    %43 = arith.truncf %35 : vector<2x32xf32> to vector<2x32xbf16>
    %cst_16 = arith.constant dense<0.000000e+00> : vector<2x96xf32>
    %44 = tpu.matmul %43, %3, %cst_16 {dimension_numbers = #tpu.dot_dimension_numbers<[1], [0], [0], [1], [0, 0, 1, 1], [], []>} : vector<2x32xbf16>, vector<32x96xbf16>, vector<2x96xf32> -> vector<2x96xf32>
    %45 = arith.addf %42, %44 : vector<2x96xf32>
    %46 = vector.extract_strided_slice %45 {offsets = [0, 0], sizes = [2, 32], strides = [1, 1]} : vector<2x96xf32> to vector<2x32xf32>
    %47 = arith.negf %46 : vector<2x32xf32>
    %48 = math.exp %47 : vector<2x32xf32>
    %cst_17 = arith.constant 1.000000e+00 : f32
    %49 = vector.broadcast %cst_17 : f32 to vector<2x32xf32>
    %50 = arith.addf %49, %48 : vector<2x32xf32>
    %51 = arith.divf %49, %50 : vector<2x32xf32>
    %52 = vector.extract_strided_slice %45 {offsets = [0, 32], sizes = [2, 32], strides = [1, 1]} : vector<2x96xf32> to vector<2x32xf32>
    %53 = arith.negf %52 : vector<2x32xf32>
    %54 = math.exp %53 : vector<2x32xf32>
    %cst_18 = arith.constant 1.000000e+00 : f32
    %55 = vector.broadcast %cst_18 : f32 to vector<2x32xf32>
    %56 = arith.addf %55, %54 : vector<2x32xf32>
    %57 = arith.divf %55, %56 : vector<2x32xf32>
    %58 = vector.extract_strided_slice %42 {offsets = [0, 64], sizes = [2, 32], strides = [1, 1]} : vector<2x96xf32> to vector<2x32xf32>
    %59 = vector.extract_strided_slice %44 {offsets = [0, 64], sizes = [2, 32], strides = [1, 1]} : vector<2x96xf32> to vector<2x32xf32>
    %60 = vector.broadcast %4 : vector<1x32xf32> to vector<2x32xf32>
    %61 = arith.addf %59, %60 : vector<2x32xf32>
    %62 = arith.mulf %51, %61 : vector<2x32xf32>
    %63 = arith.addf %58, %62 : vector<2x32xf32>
    %64 = math.tanh %63 : vector<2x32xf32>
    %cst_19 = arith.constant 1.000000e+00 : f32
    %65 = vector.broadcast %cst_19 : f32 to vector<2x32xf32>
    %66 = arith.subf %65, %57 : vector<2x32xf32>
    %67 = arith.mulf %66, %64 : vector<2x32xf32>
    %68 = arith.mulf %57, %35 : vector<2x32xf32>
    %69 = arith.addf %67, %68 : vector<2x32xf32>
    %70 = arith.index_cast %c1_i32 : i32 to index
    %c0_20 = arith.constant 0 : index
    %c0_21 = arith.constant 0 : index
    %71 = vector.load %arg4[%70, %c0_20, %c0_21] : memref<8x2x32xf32, #tpu.memory_space<vmem>>, vector<1x2x32xf32>
    %72 = vector.shape_cast %71 : vector<1x2x32xf32> to vector<2x32xf32>
    %73 = vector.shape_cast %69 : vector<2x32xf32> to vector<1x2x32xf32>
    tpu.vector_store %arg4[%70, %c0_20, %c0_21], %73 {strides = array<i32>} : memref<8x2x32xf32, #tpu.memory_space<vmem>>, vector<1x2x32xf32>,
    %c2_i32 = arith.constant 2 : i32
    %74 = arith.index_cast %c2_i32 : i32 to index
    %c0_22 = arith.constant 0 : index
    %c0_23 = arith.constant 0 : index
    %75 = vector.load %arg1[%74, %c0_22, %c0_23] : memref<8x2x96xf32, #tpu.memory_space<vmem>>, vector<1x2x96xf32>
    %76 = vector.shape_cast %75 : vector<1x2x96xf32> to vector<2x96xf32>
    %77 = arith.truncf %69 : vector<2x32xf32> to vector<2x32xbf16>
    %cst_24 = arith.constant dense<0.000000e+00> : vector<2x96xf32>
    %78 = tpu.matmul %77, %3, %cst_24 {dimension_numbers = #tpu.dot_dimension_numbers<[1], [0], [0], [1], [0, 0, 1, 1], [], []>} : vector<2x32xbf16>, vector<32x96xbf16>, vector<2x96xf32> -> vector<2x96xf32>
    %79 = arith.addf %76, %78 : vector<2x96xf32>
    %80 = vector.extract_strided_slice %79 {offsets = [0, 0], sizes = [2, 32], strides = [1, 1]} : vector<2x96xf32> to vector<2x32xf32>
    %81 = arith.negf %80 : vector<2x32xf32>
    %82 = math.exp %81 : vector<2x32xf32>
    %cst_25 = arith.constant 1.000000e+00 : f32
    %83 = vector.broadcast %cst_25 : f32 to vector<2x32xf32>
    %84 = arith.addf %83, %82 : vector<2x32xf32>
    %85 = arith.divf %83, %84 : vector<2x32xf32>
    %86 = vector.extract_strided_slice %79 {offsets = [0, 32], sizes = [2, 32], strides = [1, 1]} : vector<2x96xf32> to vector<2x32xf32>
    %87 = arith.negf %86 : vector<2x32xf32>
    %88 = math.exp %87 : vector<2x32xf32>
    %cst_26 = arith.constant 1.000000e+00 : f32
    %89 = vector.broadcast %cst_26 : f32 to vector<2x32xf32>
    %90 = arith.addf %89, %88 : vector<2x32xf32>
    %91 = arith.divf %89, %90 : vector<2x32xf32>
    %92 = vector.extract_strided_slice %76 {offsets = [0, 64], sizes = [2, 32], strides = [1, 1]} : vector<2x96xf32> to vector<2x32xf32>
    %93 = vector.extract_strided_slice %78 {offsets = [0, 64], sizes = [2, 32], strides = [1, 1]} : vector<2x96xf32> to vector<2x32xf32>
    %94 = vector.broadcast %4 : vector<1x32xf32> to vector<2x32xf32>
    %95 = arith.addf %93, %94 : vector<2x32xf32>
    %96 = arith.mulf %85, %95 : vector<2x32xf32>
    %97 = arith.addf %92, %96 : vector<2x32xf32>
    %98 = math.tanh %97 : vector<2x32xf32>
    %cst_27 = arith.constant 1.000000e+00 : f32
    %99 = vector.broadcast %cst_27 : f32 to vector<2x32xf32>
    %100 = arith.subf %99, %91 : vector<2x32xf32>
    %101 = arith.mulf %100, %98 : vector<2x32xf32>
    %102 = arith.mulf %91, %69 : vector<2x32xf32>
    %103 = arith.addf %101, %102 : vector<2x32xf32>
    %104 = arith.index_cast %c2_i32 : i32 to index
    %c0_28 = arith.constant 0 : index
    %c0_29 = arith.constant 0 : index
    %105 = vector.load %arg4[%104, %c0_28, %c0_29] : memref<8x2x32xf32, #tpu.memory_space<vmem>>, vector<1x2x32xf32>
    %106 = vector.shape_cast %105 : vector<1x2x32xf32> to vector<2x32xf32>
    %107 = vector.shape_cast %103 : vector<2x32xf32> to vector<1x2x32xf32>
    tpu.vector_store %arg4[%104, %c0_28, %c0_29], %107 {strides = array<i32>} : memref<8x2x32xf32, #tpu.memory_space<vmem>>, vector<1x2x32xf32>,
    %c3_i32 = arith.constant 3 : i32
    %108 = arith.index_cast %c3_i32 : i32 to index
    %c0_30 = arith.constant 0 : index
    %c0_31 = arith.constant 0 : index
    %109 = vector.load %arg1[%108, %c0_30, %c0_31] : memref<8x2x96xf32, #tpu.memory_space<vmem>>, vector<1x2x96xf32>
    %110 = vector.shape_cast %109 : vector<1x2x96xf32> to vector<2x96xf32>
    %111 = arith.truncf %103 : vector<2x32xf32> to vector<2x32xbf16>
    %cst_32 = arith.constant dense<0.000000e+00> : vector<2x96xf32>
    %112 = tpu.matmul %111, %3, %cst_32 {dimension_numbers = #tpu.dot_dimension_numbers<[1], [0], [0], [1], [0, 0, 1, 1], [], []>} : vector<2x32xbf16>, vector<32x96xbf16>, vector<2x96xf32> -> vector<2x96xf32>
    %113 = arith.addf %110, %112 : vector<2x96xf32>
    %114 = vector.extract_strided_slice %113 {offsets = [0, 0], sizes = [2, 32], strides = [1, 1]} : vector<2x96xf32> to vector<2x32xf32>
    %115 = arith.negf %114 : vector<2x32xf32>
    %116 = math.exp %115 : vector<2x32xf32>
    %cst_33 = arith.constant 1.000000e+00 : f32
    %117 = vector.broadcast %cst_33 : f32 to vector<2x32xf32>
    %118 = arith.addf %117, %116 : vector<2x32xf32>
    %119 = arith.divf %117, %118 : vector<2x32xf32>
    %120 = vector.extract_strided_slice %113 {offsets = [0, 32], sizes = [2, 32], strides = [1, 1]} : vector<2x96xf32> to vector<2x32xf32>
    %121 = arith.negf %120 : vector<2x32xf32>
    %122 = math.exp %121 : vector<2x32xf32>
    %cst_34 = arith.constant 1.000000e+00 : f32
    %123 = vector.broadcast %cst_34 : f32 to vector<2x32xf32>
    %124 = arith.addf %123, %122 : vector<2x32xf32>
    %125 = arith.divf %123, %124 : vector<2x32xf32>
    %126 = vector.extract_strided_slice %110 {offsets = [0, 64], sizes = [2, 32], strides = [1, 1]} : vector<2x96xf32> to vector<2x32xf32>
    %127 = vector.extract_strided_slice %112 {offsets = [0, 64], sizes = [2, 32], strides = [1, 1]} : vector<2x96xf32> to vector<2x32xf32>
    %128 = vector.broadcast %4 : vector<1x32xf32> to vector<2x32xf32>
    %129 = arith.addf %127, %128 : vector<2x32xf32>
    %130 = arith.mulf %119, %129 : vector<2x32xf32>
    %131 = arith.addf %126, %130 : vector<2x32xf32>
    %132 = math.tanh %131 : vector<2x32xf32>
    %cst_35 = arith.constant 1.000000e+00 : f32
    %133 = vector.broadcast %cst_35 : f32 to vector<2x32xf32>
    %134 = arith.subf %133, %125 : vector<2x32xf32>
    %135 = arith.mulf %134, %132 : vector<2x32xf32>
    %136 = arith.mulf %125, %103 : vector<2x32xf32>
    %137 = arith.addf %135, %136 : vector<2x32xf32>
    %138 = arith.index_cast %c3_i32 : i32 to index
    %c0_36 = arith.constant 0 : index
    %c0_37 = arith.constant 0 : index
    %139 = vector.load %arg4[%138, %c0_36, %c0_37] : memref<8x2x32xf32, #tpu.memory_space<vmem>>, vector<1x2x32xf32>
    %140 = vector.shape_cast %139 : vector<1x2x32xf32> to vector<2x32xf32>
    %141 = vector.shape_cast %137 : vector<2x32xf32> to vector<1x2x32xf32>
    tpu.vector_store %arg4[%138, %c0_36, %c0_37], %141 {strides = array<i32>} : memref<8x2x32xf32, #tpu.memory_space<vmem>>, vector<1x2x32xf32>,
    %c4_i32 = arith.constant 4 : i32
    %142 = arith.index_cast %c4_i32 : i32 to index
    %c0_38 = arith.constant 0 : index
    %c0_39 = arith.constant 0 : index
    %143 = vector.load %arg1[%142, %c0_38, %c0_39] : memref<8x2x96xf32, #tpu.memory_space<vmem>>, vector<1x2x96xf32>
    %144 = vector.shape_cast %143 : vector<1x2x96xf32> to vector<2x96xf32>
    %145 = arith.truncf %137 : vector<2x32xf32> to vector<2x32xbf16>
    %cst_40 = arith.constant dense<0.000000e+00> : vector<2x96xf32>
    %146 = tpu.matmul %145, %3, %cst_40 {dimension_numbers = #tpu.dot_dimension_numbers<[1], [0], [0], [1], [0, 0, 1, 1], [], []>} : vector<2x32xbf16>, vector<32x96xbf16>, vector<2x96xf32> -> vector<2x96xf32>
    %147 = arith.addf %144, %146 : vector<2x96xf32>
    %148 = vector.extract_strided_slice %147 {offsets = [0, 0], sizes = [2, 32], strides = [1, 1]} : vector<2x96xf32> to vector<2x32xf32>
    %149 = arith.negf %148 : vector<2x32xf32>
    %150 = math.exp %149 : vector<2x32xf32>
    %cst_41 = arith.constant 1.000000e+00 : f32
    %151 = vector.broadcast %cst_41 : f32 to vector<2x32xf32>
    %152 = arith.addf %151, %150 : vector<2x32xf32>
    %153 = arith.divf %151, %152 : vector<2x32xf32>
    %154 = vector.extract_strided_slice %147 {offsets = [0, 32], sizes = [2, 32], strides = [1, 1]} : vector<2x96xf32> to vector<2x32xf32>
    %155 = arith.negf %154 : vector<2x32xf32>
    %156 = math.exp %155 : vector<2x32xf32>
    %cst_42 = arith.constant 1.000000e+00 : f32
    %157 = vector.broadcast %cst_42 : f32 to vector<2x32xf32>
    %158 = arith.addf %157, %156 : vector<2x32xf32>
    %159 = arith.divf %157, %158 : vector<2x32xf32>
    %160 = vector.extract_strided_slice %144 {offsets = [0, 64], sizes = [2, 32], strides = [1, 1]} : vector<2x96xf32> to vector<2x32xf32>
    %161 = vector.extract_strided_slice %146 {offsets = [0, 64], sizes = [2, 32], strides = [1, 1]} : vector<2x96xf32> to vector<2x32xf32>
    %162 = vector.broadcast %4 : vector<1x32xf32> to vector<2x32xf32>
    %163 = arith.addf %161, %162 : vector<2x32xf32>
    %164 = arith.mulf %153, %163 : vector<2x32xf32>
    %165 = arith.addf %160, %164 : vector<2x32xf32>
    %166 = math.tanh %165 : vector<2x32xf32>
    %cst_43 = arith.constant 1.000000e+00 : f32
    %167 = vector.broadcast %cst_43 : f32 to vector<2x32xf32>
    %168 = arith.subf %167, %159 : vector<2x32xf32>
    %169 = arith.mulf %168, %166 : vector<2x32xf32>
    %170 = arith.mulf %159, %137 : vector<2x32xf32>
    %171 = arith.addf %169, %170 : vector<2x32xf32>
    %172 = arith.index_cast %c4_i32 : i32 to index
    %c0_44 = arith.constant 0 : index
    %c0_45 = arith.constant 0 : index
    %173 = vector.load %arg4[%172, %c0_44, %c0_45] : memref<8x2x32xf32, #tpu.memory_space<vmem>>, vector<1x2x32xf32>
    %174 = vector.shape_cast %173 : vector<1x2x32xf32> to vector<2x32xf32>
    %175 = vector.shape_cast %171 : vector<2x32xf32> to vector<1x2x32xf32>
    tpu.vector_store %arg4[%172, %c0_44, %c0_45], %175 {strides = array<i32>} : memref<8x2x32xf32, #tpu.memory_space<vmem>>, vector<1x2x32xf32>,
    %c5_i32 = arith.constant 5 : i32
    %176 = arith.index_cast %c5_i32 : i32 to index
    %c0_46 = arith.constant 0 : index
    %c0_47 = arith.constant 0 : index
    %177 = vector.load %arg1[%176, %c0_46, %c0_47] : memref<8x2x96xf32, #tpu.memory_space<vmem>>, vector<1x2x96xf32>
    %178 = vector.shape_cast %177 : vector<1x2x96xf32> to vector<2x96xf32>
    %179 = arith.truncf %171 : vector<2x32xf32> to vector<2x32xbf16>
    %cst_48 = arith.constant dense<0.000000e+00> : vector<2x96xf32>
    %180 = tpu.matmul %179, %3, %cst_48 {dimension_numbers = #tpu.dot_dimension_numbers<[1], [0], [0], [1], [0, 0, 1, 1], [], []>} : vector<2x32xbf16>, vector<32x96xbf16>, vector<2x96xf32> -> vector<2x96xf32>
    %181 = arith.addf %178, %180 : vector<2x96xf32>
    %182 = vector.extract_strided_slice %181 {offsets = [0, 0], sizes = [2, 32], strides = [1, 1]} : vector<2x96xf32> to vector<2x32xf32>
    %183 = arith.negf %182 : vector<2x32xf32>
    %184 = math.exp %183 : vector<2x32xf32>
    %cst_49 = arith.constant 1.000000e+00 : f32
    %185 = vector.broadcast %cst_49 : f32 to vector<2x32xf32>
    %186 = arith.addf %185, %184 : vector<2x32xf32>
    %187 = arith.divf %185, %186 : vector<2x32xf32>
    %188 = vector.extract_strided_slice %181 {offsets = [0, 32], sizes = [2, 32], strides = [1, 1]} : vector<2x96xf32> to vector<2x32xf32>
    %189 = arith.negf %188 : vector<2x32xf32>
    %190 = math.exp %189 : vector<2x32xf32>
    %cst_50 = arith.constant 1.000000e+00 : f32
    %191 = vector.broadcast %cst_50 : f32 to vector<2x32xf32>
    %192 = arith.addf %191, %190 : vector<2x32xf32>
    %193 = arith.divf %191, %192 : vector<2x32xf32>
    %194 = vector.extract_strided_slice %178 {offsets = [0, 64], sizes = [2, 32], strides = [1, 1]} : vector<2x96xf32> to vector<2x32xf32>
    %195 = vector.extract_strided_slice %180 {offsets = [0, 64], sizes = [2, 32], strides = [1, 1]} : vector<2x96xf32> to vector<2x32xf32>
    %196 = vector.broadcast %4 : vector<1x32xf32> to vector<2x32xf32>
    %197 = arith.addf %195, %196 : vector<2x32xf32>
    %198 = arith.mulf %187, %197 : vector<2x32xf32>
    %199 = arith.addf %194, %198 : vector<2x32xf32>
    %200 = math.tanh %199 : vector<2x32xf32>
    %cst_51 = arith.constant 1.000000e+00 : f32
    %201 = vector.broadcast %cst_51 : f32 to vector<2x32xf32>
    %202 = arith.subf %201, %193 : vector<2x32xf32>
    %203 = arith.mulf %202, %200 : vector<2x32xf32>
    %204 = arith.mulf %193, %171 : vector<2x32xf32>
    %205 = arith.addf %203, %204 : vector<2x32xf32>
    %206 = arith.index_cast %c5_i32 : i32 to index
    %c0_52 = arith.constant 0 : index
    %c0_53 = arith.constant 0 : index
    %207 = vector.load %arg4[%206, %c0_52, %c0_53] : memref<8x2x32xf32, #tpu.memory_space<vmem>>, vector<1x2x32xf32>
    %208 = vector.shape_cast %207 : vector<1x2x32xf32> to vector<2x32xf32>
    %209 = vector.shape_cast %205 : vector<2x32xf32> to vector<1x2x32xf32>
    tpu.vector_store %arg4[%206, %c0_52, %c0_53], %209 {strides = array<i32>} : memref<8x2x32xf32, #tpu.memory_space<vmem>>, vector<1x2x32xf32>,
    %c6_i32 = arith.constant 6 : i32
    %210 = arith.index_cast %c6_i32 : i32 to index
    %c0_54 = arith.constant 0 : index
    %c0_55 = arith.constant 0 : index
    %211 = vector.load %arg1[%210, %c0_54, %c0_55] : memref<8x2x96xf32, #tpu.memory_space<vmem>>, vector<1x2x96xf32>
    %212 = vector.shape_cast %211 : vector<1x2x96xf32> to vector<2x96xf32>
    %213 = arith.truncf %205 : vector<2x32xf32> to vector<2x32xbf16>
    %cst_56 = arith.constant dense<0.000000e+00> : vector<2x96xf32>
    %214 = tpu.matmul %213, %3, %cst_56 {dimension_numbers = #tpu.dot_dimension_numbers<[1], [0], [0], [1], [0, 0, 1, 1], [], []>} : vector<2x32xbf16>, vector<32x96xbf16>, vector<2x96xf32> -> vector<2x96xf32>
    %215 = arith.addf %212, %214 : vector<2x96xf32>
    %216 = vector.extract_strided_slice %215 {offsets = [0, 0], sizes = [2, 32], strides = [1, 1]} : vector<2x96xf32> to vector<2x32xf32>
    %217 = arith.negf %216 : vector<2x32xf32>
    %218 = math.exp %217 : vector<2x32xf32>
    %cst_57 = arith.constant 1.000000e+00 : f32
    %219 = vector.broadcast %cst_57 : f32 to vector<2x32xf32>
    %220 = arith.addf %219, %218 : vector<2x32xf32>
    %221 = arith.divf %219, %220 : vector<2x32xf32>
    %222 = vector.extract_strided_slice %215 {offsets = [0, 32], sizes = [2, 32], strides = [1, 1]} : vector<2x96xf32> to vector<2x32xf32>
    %223 = arith.negf %222 : vector<2x32xf32>
    %224 = math.exp %223 : vector<2x32xf32>
    %cst_58 = arith.constant 1.000000e+00 : f32
    %225 = vector.broadcast %cst_58 : f32 to vector<2x32xf32>
    %226 = arith.addf %225, %224 : vector<2x32xf32>
    %227 = arith.divf %225, %226 : vector<2x32xf32>
    %228 = vector.extract_strided_slice %212 {offsets = [0, 64], sizes = [2, 32], strides = [1, 1]} : vector<2x96xf32> to vector<2x32xf32>
    %229 = vector.extract_strided_slice %214 {offsets = [0, 64], sizes = [2, 32], strides = [1, 1]} : vector<2x96xf32> to vector<2x32xf32>
    %230 = vector.broadcast %4 : vector<1x32xf32> to vector<2x32xf32>
    %231 = arith.addf %229, %230 : vector<2x32xf32>
    %232 = arith.mulf %221, %231 : vector<2x32xf32>
    %233 = arith.addf %228, %232 : vector<2x32xf32>
    %234 = math.tanh %233 : vector<2x32xf32>
    %cst_59 = arith.constant 1.000000e+00 : f32
    %235 = vector.broadcast %cst_59 : f32 to vector<2x32xf32>
    %236 = arith.subf %235, %227 : vector<2x32xf32>
    %237 = arith.mulf %236, %234 : vector<2x32xf32>
    %238 = arith.mulf %227, %205 : vector<2x32xf32>
    %239 = arith.addf %237, %238 : vector<2x32xf32>
    %240 = arith.index_cast %c6_i32 : i32 to index
    %c0_60 = arith.constant 0 : index
    %c0_61 = arith.constant 0 : index
    %241 = vector.load %arg4[%240, %c0_60, %c0_61] : memref<8x2x32xf32, #tpu.memory_space<vmem>>, vector<1x2x32xf32>
    %242 = vector.shape_cast %241 : vector<1x2x32xf32> to vector<2x32xf32>
    %243 = vector.shape_cast %239 : vector<2x32xf32> to vector<1x2x32xf32>
    tpu.vector_store %arg4[%240, %c0_60, %c0_61], %243 {strides = array<i32>} : memref<8x2x32xf32, #tpu.memory_space<vmem>>, vector<1x2x32xf32>,
    %c7_i32 = arith.constant 7 : i32
    %244 = arith.index_cast %c7_i32 : i32 to index
    %c0_62 = arith.constant 0 : index
    %c0_63 = arith.constant 0 : index
    %245 = vector.load %arg1[%244, %c0_62, %c0_63] : memref<8x2x96xf32, #tpu.memory_space<vmem>>, vector<1x2x96xf32>
    %246 = vector.shape_cast %245 : vector<1x2x96xf32> to vector<2x96xf32>
    %247 = arith.truncf %239 : vector<2x32xf32> to vector<2x32xbf16>
    %cst_64 = arith.constant dense<0.000000e+00> : vector<2x96xf32>
    %248 = tpu.matmul %247, %3, %cst_64 {dimension_numbers = #tpu.dot_dimension_numbers<[1], [0], [0], [1], [0, 0, 1, 1], [], []>} : vector<2x32xbf16>, vector<32x96xbf16>, vector<2x96xf32> -> vector<2x96xf32>
    %249 = arith.addf %246, %248 : vector<2x96xf32>
    %250 = vector.extract_strided_slice %249 {offsets = [0, 0], sizes = [2, 32], strides = [1, 1]} : vector<2x96xf32> to vector<2x32xf32>
    %251 = arith.negf %250 : vector<2x32xf32>
    %252 = math.exp %251 : vector<2x32xf32>
    %cst_65 = arith.constant 1.000000e+00 : f32
    %253 = vector.broadcast %cst_65 : f32 to vector<2x32xf32>
    %254 = arith.addf %253, %252 : vector<2x32xf32>
    %255 = arith.divf %253, %254 : vector<2x32xf32>
    %256 = vector.extract_strided_slice %249 {offsets = [0, 32], sizes = [2, 32], strides = [1, 1]} : vector<2x96xf32> to vector<2x32xf32>
    %257 = arith.negf %256 : vector<2x32xf32>
    %258 = math.exp %257 : vector<2x32xf32>
    %cst_66 = arith.constant 1.000000e+00 : f32
    %259 = vector.broadcast %cst_66 : f32 to vector<2x32xf32>
    %260 = arith.addf %259, %258 : vector<2x32xf32>
    %261 = arith.divf %259, %260 : vector<2x32xf32>
    %262 = vector.extract_strided_slice %246 {offsets = [0, 64], sizes = [2, 32], strides = [1, 1]} : vector<2x96xf32> to vector<2x32xf32>
    %263 = vector.extract_strided_slice %248 {offsets = [0, 64], sizes = [2, 32], strides = [1, 1]} : vector<2x96xf32> to vector<2x32xf32>
    %264 = vector.broadcast %4 : vector<1x32xf32> to vector<2x32xf32>
    %265 = arith.addf %263, %264 : vector<2x32xf32>
    %266 = arith.mulf %255, %265 : vector<2x32xf32>
    %267 = arith.addf %262, %266 : vector<2x32xf32>
    %268 = math.tanh %267 : vector<2x32xf32>
    %cst_67 = arith.constant 1.000000e+00 : f32
    %269 = vector.broadcast %cst_67 : f32 to vector<2x32xf32>
    %270 = arith.subf %269, %261 : vector<2x32xf32>
    %271 = arith.mulf %270, %268 : vector<2x32xf32>
    %272 = arith.mulf %261, %239 : vector<2x32xf32>
    %273 = arith.addf %271, %272 : vector<2x32xf32>
    %274 = arith.index_cast %c7_i32 : i32 to index
    %c0_68 = arith.constant 0 : index
    %c0_69 = arith.constant 0 : index
    %275 = vector.load %arg4[%274, %c0_68, %c0_69] : memref<8x2x32xf32, #tpu.memory_space<vmem>>, vector<1x2x32xf32>
    %276 = vector.shape_cast %275 : vector<1x2x32xf32> to vector<2x32xf32>
    %277 = vector.shape_cast %273 : vector<2x32xf32> to vector<1x2x32xf32>
    tpu.vector_store %arg4[%274, %c0_68, %c0_69], %277 {strides = array<i32>} : memref<8x2x32xf32, #tpu.memory_space<vmem>>, vector<1x2x32xf32>,
    %c8_i32 = arith.constant 8 : i32
    %c0_70 = arith.constant 0 : index
    %c0_71 = arith.constant 0 : index
    %278 = vector.load %arg5[%c0_70, %c0_71] : memref<2x32xf32, #tpu.memory_space<vmem>>, vector<2x32xf32>
    tpu.vector_store %arg5[%c0_70, %c0_71], %273 {strides = array<i32>} : memref<2x32xf32, #tpu.memory_space<vmem>>, vector<2x32xf32>,
    return
  }
  func.func @transform_0(%arg0: i32) -> (i32, i32, i32) {
    %c0_i32 = arith.constant 0 : i32
    %c0_i32_0 = arith.constant 0 : i32
    %c0_i32_1 = arith.constant 0 : i32
    return %arg0, %c0_i32, %c0_i32_0 : i32, i32, i32
  }
  func.func @transform_1(%arg0: i32) -> (i32, i32) {
    %c0_i32 = arith.constant 0 : i32
    %c0_i32_0 = arith.constant 0 : i32
    %c0_i32_1 = arith.constant 0 : i32
    return %c0_i32, %c0_i32_0 : i32, i32
  }
  func.func @transform_2(%arg0: i32) -> (i32, i32) {
    %c0_i32 = arith.constant 0 : i32
    %c0_i32_0 = arith.constant 0 : i32
    %c0_i32_1 = arith.constant 0 : i32
    return %c0_i32, %c0_i32_0 : i32, i32
  }
  func.func @transform_3(%arg0: i32) -> (i32, i32, i32) {
    %c0_i32 = arith.constant 0 : i32
    %c0_i32_0 = arith.constant 0 : i32
    %c0_i32_1 = arith.constant 0 : i32
    return %arg0, %c0_i32, %c0_i32_0 : i32, i32, i32
  }
}

</mosaic_0001>

<llo_original>
// kernel: gru_rnn_forward.6
$region0: #{gru_rnn_forward.6}
  #allocation0 [shape = 'u32[]', space=smem, size = 0x4, offset = 0x4, fixed_abs, tag = 'smem constant byte address 0x4 - core index']
  #allocation1 [shape = 'u32[144,128]{1,0:T(1,128)}', space=vmem, size = 0x12000, scoped, tag = 'internal scratch']
  %s0 = inlined_call_operand.vmem [shape: bf16[16,32], index: 0, kind: input, shape index: {}]
  %s1 = inlined_call_operand.vmem [shape: bf16[32,96], index: 1, kind: input, shape index: {}]
  %s2 = inlined_call_operand.vmem [shape: f32[1,96], index: 2, kind: input, shape index: {}]
  %s3 = inlined_call_operand.vmem [shape: f32[16,96], index: 3, kind: output, shape index: {}]
  %s4 = sld [smem:[#allocation0]]
  $region22: #{gru_rnn_forward.6} parent=0
    _
  %s6 = ssub.s32 1, %s4
  %s7 = scalar_select 0, %s6, %s4
  // Predicated region
  $region2: #{gru_rnn_forward.6} parent=0 // pred_check
    _
  $region3: #{gru_rnn_forward.6} parent=0 // pred_check_branch
    %9 = sbr.rel (0) target = $region5
  $region4: #{gru_rnn_forward.6} parent=0 // pred_region
    _
  $region5: #{gru_rnn_forward.6} parent=0 // pred_fallthru
    _
  // Predicated region
  $region6: #{gru_rnn_forward.6} parent=0 // pred_check
    _
  $region7: #{gru_rnn_forward.6} parent=0 // pred_check_branch
    %11 = sbr.rel (0) target = $region9
  $region8: #{gru_rnn_forward.6} parent=0 // pred_region
    _
  $region9: #{gru_rnn_forward.6} parent=0 // pred_fallthru
    _
  // Predicated region
  $region10: #{gru_rnn_forward.6} parent=0 // pred_check
    _
  $region11: #{gru_rnn_forward.6} parent=0 // pred_check_branch
    %13 = sbr.rel (0) target = $region13
  $region12: #{gru_rnn_forward.6} parent=0 // pred_region
    _
  $region13: #{gru_rnn_forward.6} parent=0 // pred_fallthru
    _
  %v15 = vld [vmem:[%s0] sm:$0xf]
  %v16 = vld [vmem:[%s0 + $0x4] sm:$0xf]
  %v17 = vld [vmem:[%s1] sm:$0xf]
  %v18 = vld [vmem:[%s1 + $0x4] sm:$0xf]
  %v19 = vld [vmem:[%s1 + $0x8] sm:$0xf]
  %v20 = vld [vmem:[%s1 + $0xc] sm:$0xf]
  %v21 = vld [vmem:[%s2] sm:$0x1]
  %v23 = vlaneseq
  %v24 = vshrl.u32 %v23, 7
  %v25 = vsub.s32 0, %v24
  %v26 = vrot.slane %v21, %v25
  %v30 = vunpack.c.l.b16 %v15
  %v31 = vunpack.c.l.b16 %v16
  %v32 = vpack.c.b16 %v31, %v30
  %v37 = vunpack.c.l.b16 %v17
  %v38 = vunpack.c.l.b16 %v18
  %v39 = vunpack.c.l.b16 %v19
  %v40 = vunpack.c.l.b16 %v20
  %v41 = vpack.c.b16 %v38, %v37
  %v42 = vpack.c.b16 %v40, %v39
  %vm45 = vcmask 261120
  %v47 = vsel %vm45, %v32, 0
  %49 = vmatprep.subr.bf16.mxu0 0
  %50 = vmatpush1.bf16.msra.mxu0 0
  %51 = vmatprep.subr.bf16.mxu0 0
  %52 = vmatpush1.bf16.msra.mxu0 0
  %53 = vmatprep.subr.bf16.mxu0 0
  %54 = vmatpush1.bf16.msra.mxu0 0
  %55 = vmatprep.subr.bf16.mxu0 0
  %56 = vmatpush1.bf16.msra.mxu0 0
  %57 = vmatprep.subr.bf16.mxu0 0
  %58 = vmatpush1.bf16.msra.mxu0 0
  %59 = vmatprep.subr.bf16.mxu0 0
  %60 = vmatpush1.bf16.msra.mxu0 0
  %61 = vmatprep.subr.bf16.mxu0 0
  %62 = vmatpush1.bf16.msra.mxu0 %v42
  %63 = vmatprep.subr.bf16.mxu0 0
  %64 = vmatpush1.bf16.msra.mxu0 %v41
  %65 = vmatprep.subr.bf16.mxu0 0
  %66 = vmatpush2.bf16.msra.mxu0 0
  %67 = vmatprep.subr.bf16.mxu0 0
  %68 = vmatpush2.bf16.msra.mxu0 0
  %69 = vmatprep.subr.bf16.mxu0 0
  %70 = vmatpush2.bf16.msra.mxu0 0
  %71 = vmatprep.subr.bf16.mxu0 0
  %72 = vmatpush2.bf16.msra.mxu0 0
  %73 = vmatprep.subr.bf16.mxu0 0
  %74 = vmatpush2.bf16.msra.mxu0 0
  %75 = vmatprep.subr.bf16.mxu0 0
  %76 = vmatpush2.bf16.msra.mxu0 0
  %77 = vmatprep.subr.bf16.mxu0 0
  %78 = vmatpush2.bf16.msra.mxu0 0
  %79 = vmatprep.subr.bf16.mxu0 0
  %80 = vmatpush2.bf16.msra.mxu0 0
  %81 = vmatprep.mubr.bf16.mxu0 0
  %82 = vmatmul.mubr.bf16.gmra.mxu0 %v47
  %v83 = vpop.f32.mrf.mxu0
  %v84 = vadd.f32 %v26, %v83
  %v85 = vpop.f32.mrf.mxu0
  %v86 = vpop.f32.mrf.mxu0
  %v87 = vadd.f32 %v26, %v86
  %v88 = vpop.f32.mrf.mxu0
  %89 = vdwg.mxu0
  %vm90 = vcmask 785408
  %91 = vst.msk [vmem:[%s3] sm:$0xff] %vm90, %v84
  %92 = vst.msk [vmem:[%s3 + $0x8] sm:$0xff] %vm90, %v87
  // Predicated region
  $region14: #{gru_rnn_forward.6} parent=0 // pred_check
    _
  $region15: #{gru_rnn_forward.6} parent=0 // pred_check_branch
    %94 = sbr.rel (0) target = $region17
  $region16: #{gru_rnn_forward.6} parent=0 // pred_region
    _
  $region17: #{gru_rnn_forward.6} parent=0 // pred_fallthru
    _
  // Predicated region
  $region18: #{gru_rnn_forward.6} parent=0 // pred_check
    _
  $region19: #{gru_rnn_forward.6} parent=0 // pred_check_branch
    %96 = sbr.rel (0) target = $region21
  $region20: #{gru_rnn_forward.6} parent=0 // pred_region
    _
  $region21: #{gru_rnn_forward.6} parent=0 // pred_fallthru
    _

// kernel: gru_rnn_forward.4
$region0: #{gru_rnn_forward.4}
  #allocation0 [shape = 'u32[]', space=smem, size = 0x4, offset = 0x4, fixed_abs, tag = 'smem constant byte address 0x4 - core index']
  #allocation1 [shape = 'u32[144,128]{1,0:T(1,128)}', space=vmem, size = 0x12000, scoped, tag = 'internal scratch']
  %s0 = inlined_call_operand.vmem [shape: bf16[16,4], index: 0, kind: input, shape index: {}]
  %s1 = inlined_call_operand.vmem [shape: bf16[4,96], index: 1, kind: input, shape index: {}]
  %s2 = inlined_call_operand.vmem [shape: f32[1,96], index: 2, kind: input, shape index: {}]
  %s3 = inlined_call_operand.vmem [shape: f32[16,96], index: 3, kind: output, shape index: {}]
  %s4 = sld [smem:[#allocation0]]
  $region22: #{gru_rnn_forward.4} parent=0
    _
  %s6 = ssub.s32 1, %s4
  %s7 = scalar_select 0, %s6, %s4
  // Predicated region
  $region2: #{gru_rnn_forward.4} parent=0 // pred_check
    _
  $region3: #{gru_rnn_forward.4} parent=0 // pred_check_branch
    %9 = sbr.rel (0) target = $region5
  $region4: #{gru_rnn_forward.4} parent=0 // pred_region
    _
  $region5: #{gru_rnn_forward.4} parent=0 // pred_fallthru
    _
  // Predicated region
  $region6: #{gru_rnn_forward.4} parent=0 // pred_check
    _
  $region7: #{gru_rnn_forward.4} parent=0 // pred_check_branch
    %11 = sbr.rel (0) target = $region9
  $region8: #{gru_rnn_forward.4} parent=0 // pred_region
    _
  $region9: #{gru_rnn_forward.4} parent=0 // pred_fallthru
    _
  // Predicated region
  $region10: #{gru_rnn_forward.4} parent=0 // pred_check
    _
  $region11: #{gru_rnn_forward.4} parent=0 // pred_check_branch
    %13 = sbr.rel (0) target = $region13
  $region12: #{gru_rnn_forward.4} parent=0 // pred_region
    _
  $region13: #{gru_rnn_forward.4} parent=0 // pred_fallthru
    _
  %v15 = vld [vmem:[%s0] sm:$0xf]
  %v16 = vld [vmem:[%s0 + $0x4] sm:$0xf]
  %v17 = vld [vmem:[%s1] sm:$0x3]
  %v18 = vld [vmem:[%s2] sm:$0x1]
  %v20 = vlaneseq
  %v21 = vshrl.u32 %v20, 7
  %v22 = vsub.s32 0, %v21
  %v23 = vrot.slane %v18, %v22
  %v27 = vunpack.c.l.b16 %v15
  %v28 = vunpack.c.l.b16 %v16
  %v29 = vpack.c.b16 %v28, %v27
  %vm30 = vcmask 31744
  %v32 = vsel %vm30, %v29, 0
  %vm34 = vcmask 1041408
  %v36 = vsel %vm34, %v17, 0
  %38 = vmatprep.subr.bf16.mxu0 0
  %39 = vmatpush1.bf16.msra.mxu0 0
  %40 = vmatprep.subr.bf16.mxu0 0
  %41 = vmatpush1.bf16.msra.mxu0 0
  %42 = vmatprep.subr.bf16.mxu0 0
  %43 = vmatpush1.bf16.msra.mxu0 0
  %44 = vmatprep.subr.bf16.mxu0 0
  %45 = vmatpush1.bf16.msra.mxu0 0
  %46 = vmatprep.subr.bf16.mxu0 0
  %47 = vmatpush1.bf16.msra.mxu0 0
  %48 = vmatprep.subr.bf16.mxu0 0
  %49 = vmatpush1.bf16.msra.mxu0 0
  %50 = vmatprep.subr.bf16.mxu0 0
  %51 = vmatpush1.bf16.msra.mxu0 0
  %52 = vmatprep.subr.bf16.mxu0 0
  %53 = vmatpush1.bf16.msra.mxu0 %v36
  %54 = vmatprep.subr.bf16.mxu0 0
  %55 = vmatpush2.bf16.msra.mxu0 0
  %56 = vmatprep.subr.bf16.mxu0 0
  %57 = vmatpush2.bf16.msra.mxu0 0
  %58 = vmatprep.subr.bf16.mxu0 0
  %59 = vmatpush2.bf16.msra.mxu0 0
  %60 = vmatprep.subr.bf16.mxu0 0
  %61 = vmatpush2.bf16.msra.mxu0 0
  %62 = vmatprep.subr.bf16.mxu0 0
  %63 = vmatpush2.bf16.msra.mxu0 0
  %64 = vmatprep.subr.bf16.mxu0 0
  %65 = vmatpush2.bf16.msra.mxu0 0
  %66 = vmatprep.subr.bf16.mxu0 0
  %67 = vmatpush2.bf16.msra.mxu0 0
  %68 = vmatprep.subr.bf16.mxu0 0
  %69 = vmatpush2.bf16.msra.mxu0 0
  %70 = vmatprep.mubr.bf16.mxu0 0
  %71 = vmatmul.mubr.bf16.gmra.mxu0 %v32
  %v72 = vpop.f32.mrf.mxu0
  %v73 = vadd.f32 %v23, %v72
  %v74 = vpop.f32.mrf.mxu0
  %v75 = vpop.f32.mrf.mxu0
  %v76 = vadd.f32 %v23, %v75
  %v77 = vpop.f32.mrf.mxu0
  %78 = vdwg.mxu0
  %vm79 = vcmask 785408
  %80 = vst.msk [vmem:[%s3] sm:$0xff] %vm79, %v73
  %81 = vst.msk [vmem:[%s3 + $0x8] sm:$0xff] %vm79, %v76
  // Predicated region
  $region14: #{gru_rnn_forward.4} parent=0 // pred_check
    _
  $region15: #{gru_rnn_forward.4} parent=0 // pred_check_branch
    %83 = sbr.rel (0) target = $region17
  $region16: #{gru_rnn_forward.4} parent=0 // pred_region
    _
  $region17: #{gru_rnn_forward.4} parent=0 // pred_fallthru
    _
  // Predicated region
  $region18: #{gru_rnn_forward.4} parent=0 // pred_check
    _
  $region19: #{gru_rnn_forward.4} parent=0 // pred_check_branch
    %85 = sbr.rel (0) target = $region21
  $region20: #{gru_rnn_forward.4} parent=0 // pred_region
    _
  $region21: #{gru_rnn_forward.4} parent=0 // pred_fallthru
    _

// kernel: gru_rnn_forward.5
$region0: #{gru_rnn_forward.5}
  #allocation0 [shape = 'u32[]', space=smem, size = 0x4, offset = 0x4, fixed_abs, tag = 'smem constant byte address 0x4 - core index']
  #allocation1 [shape = 'u32[144,128]{1,0:T(1,128)}', space=vmem, size = 0x12000, scoped, tag = 'internal scratch']
  #allocation2 [shape = 'f32[2,32]{1,0:T(2,128)}', space=vmem, size = 0x400, scoped, tag = 'scratch operand']
  %s0 = inlined_call_operand.vmem [shape: f32[8,2,96], index: 0, kind: input, shape index: {}]
  %s1 = inlined_call_operand.vmem [shape: bf16[32,96], index: 1, kind: input, shape index: {}]
  %s2 = inlined_call_operand.vmem [shape: f32[1,32], index: 2, kind: input, shape index: {}]
  %s3 = inlined_call_operand.vmem [shape: f32[8,2,32], index: 3, kind: output, shape index: {}]
  %s4 = sld [smem:[#allocation0]]
  $region26: #{gru_rnn_forward.5} parent=0
    _
  %s6 = ssub.s32 1, %s4
  %s7 = scalar_select 0, %s6, %s4
  // Predicated region
  $region2: #{gru_rnn_forward.5} parent=0 // pred_check
    _
  $region3: #{gru_rnn_forward.5} parent=0 // pred_check_branch
    %9 = sbr.rel (0) target = $region5
  $region4: #{gru_rnn_forward.5} parent=0 // pred_region
    _
  $region5: #{gru_rnn_forward.5} parent=0 // pred_fallthru
    _
  // Predicated region
  $region6: #{gru_rnn_forward.5} parent=0 // pred_check
    _
  $region7: #{gru_rnn_forward.5} parent=0 // pred_check_branch
    %11 = sbr.rel (0) target = $region9
  $region8: #{gru_rnn_forward.5} parent=0 // pred_region
    _
  $region9: #{gru_rnn_forward.5} parent=0 // pred_fallthru
    _
  // Predicated region
  $region10: #{gru_rnn_forward.5} parent=0 // pred_check
    _
  $region11: #{gru_rnn_forward.5} parent=0 // pred_check_branch
    %13 = sbr.rel (0) target = $region13
  $region12: #{gru_rnn_forward.5} parent=0 // pred_region
    _
  $region13: #{gru_rnn_forward.5} parent=0 // pred_fallthru
    _
  %p15 = scmp.eq.s32.totalorder 0, 0
  // Predicated region
  $region14: #{gru_rnn_forward.5} parent=0 // pred_check
    %p16 = pneg %p15
  $region15: #{gru_rnn_forward.5} parent=0 // pred_check_branch
    %18 = sbr.rel (%p16) target = $region17
  $region16: #{gru_rnn_forward.5} parent=0 // pred_region
    %vm19 = vcmask 254976
    %20 = vst.msk [vmem:[#allocation2] sm:$0x3] %vm19, 0.0
  $region17: #{gru_rnn_forward.5} parent=0 // pred_fallthru
    _
  %v21 = vld [vmem:[%s1] sm:$0xf]
  %v22 = vld [vmem:[%s1 + $0x4] sm:$0xf]
  %v23 = vld [vmem:[%s1 + $0x8] sm:$0xf]
  %v24 = vld [vmem:[%s1 + $0xc] sm:$0xf]
  %v25 = vld [vmem:[%s2] sm:$0x1]
  %v26 = vld [vmem:[#allocation2] sm:$0x3]
  %v27 = vld [vmem:[%s0] sm:$0x3]
  %v28 = vpack.c.bf16 %v26, %v26
  %v33 = vunpack.c.l.b16 %v21
  %v34 = vunpack.c.l.b16 %v22
  %v35 = vunpack.c.l.b16 %v23
  %v36 = vunpack.c.l.b16 %v24
  %v37 = vpack.c.b16 %v34, %v33
  %v38 = vpack.c.b16 %v36, %v35
  %vm41 = vcmask 261120
  %v43 = vsel %vm41, %v28, 0
  %45 = vmatprep.subr.bf16.mxu0 0
  %46 = vmatpush1.bf16.msra.mxu0 0
  %47 = vmatprep.subr.bf16.mxu0 0
  %48 = vmatpush1.bf16.msra.mxu0 0
  %49 = vmatprep.subr.bf16.mxu0 0
  %50 = vmatpush1.bf16.msra.mxu0 0
  %51 = vmatprep.subr.bf16.mxu0 0
  %52 = vmatpush1.bf16.msra.mxu0 0
  %53 = vmatprep.subr.bf16.mxu0 0
  %54 = vmatpush1.bf16.msra.mxu0 0
  %55 = vmatprep.subr.bf16.mxu0 0
  %56 = vmatpush1.bf16.msra.mxu0 0
  %57 = vmatprep.subr.bf16.mxu0 0
  %58 = vmatpush1.bf16.msra.mxu0 %v38
  %59 = vmatprep.subr.bf16.mxu0 0
  %60 = vmatpush1.bf16.msra.mxu0 %v37
  %61 = vmatprep.subr.bf16.mxu0 0
  %62 = vmatpush2.bf16.msra.mxu0 0
  %63 = vmatprep.subr.bf16.mxu0 0
  %64 = vmatpush2.bf16.msra.mxu0 0
  %65 = vmatprep.subr.bf16.mxu0 0
  %66 = vmatpush2.bf16.msra.mxu0 0
  %67 = vmatprep.subr.bf16.mxu0 0
  %68 = vmatpush2.bf16.msra.mxu0 0
  %69 = vmatprep.subr.bf16.mxu0 0
  %70 = vmatpush2.bf16.msra.mxu0 0
  %71 = vmatprep.subr.bf16.mxu0 0
  %72 = vmatpush2.bf16.msra.mxu0 0
  %73 = vmatprep.subr.bf16.mxu0 0
  %74 = vmatpush2.bf16.msra.mxu0 0
  %75 = vmatprep.subr.bf16.mxu0 0
  %76 = vmatpush2.bf16.msra.mxu0 0
  %77 = vmatprep.mubr.bf16.mxu0 0
  %78 = vmatmul.mubr.bf16.gmra.mxu0 %v43
  %v79 = vpop.f32.mrf.mxu0
  %v80 = vadd.f32 0.0, %v79
  %v81 = vpop.f32.mrf.mxu0
  %v82 = vpop.f32.mrf.mxu0
  %v83 = vpop.f32.mrf.mxu0
  %84 = vdwg.mxu0
  %v85 = vadd.f32 %v27, %v80
  %v86 = vxor.u32 %v85, 2147483648
  %v87 = vmul.f32 %v86, 1.442695
  %v88 = vpow.pop %v87
  %v89 = vadd.f32 %v88, 1.0
  %v90 = vrcp.pop %v89
  %v91 = vmul.f32 1.0, %v90
  %v93 = vlaneseq
  %v94 = vshrl.u32 %v93, 7
  %v95 = vsub.s32 0, %v94
  %v96 = vrot.slane %v25, %v95
  %97 = vrot.lane.b32.xlu0 %v96, 64
  %v98 = vpop.permute.xlu0 %97
  %v100 = vadd.f32 %v80, %v98
  %102 = vrot.lane.b32.xlu0 %v100, 64
  %v103 = vpop.permute.xlu0 %102
  %v105 = vmul.f32 %v91, %v103
  %107 = vrot.lane.b32.xlu0 %v105, 64
  %v108 = vpop.permute.xlu0 %107
  %v110 = vadd.f32 %v27, %v108
  %v111 = vtanh.pop %v110
  %v112 = vsub.f32 1.0, %v91
  %114 = vrot.lane.b32.xlu0 %v111, 96
  %v115 = vpop.permute.xlu0 %114
  %v117 = vmul.f32 %v112, %v115
  %119 = vrot.lane.b32.xlu0 %v26, 32
  %v120 = vpop.permute.xlu0 %119
  %v122 = vmul.f32 %v91, %v120
  %v123 = vadd.f32 %v117, %v122
  %125 = vrot.lane.b32.xlu0 %v123, 96
  %v126 = vpop.permute.xlu0 %125
  %vm128 = vcmask 254976
  %129 = vst.msk [vmem:[%s3] sm:$0x3] %vm128, %v126
  %s130 = scalar_lea.vmem %s0, 2
  %v131 = vld [vmem:[%s130] sm:$0x3]
  %v132 = vpack.c.bf16 %v123, %v123
  %134 = vrot.lane.b32.xlu0 %v132, 96
  %v135 = vpop.permute.xlu0 %134
  %v137 = vsel %vm41, %v135, 0
  %139 = vmatprep.subr.bf16.mxu0 0
  %140 = vmatpush1.bf16.msra.mxu0 0
  %141 = vmatprep.subr.bf16.mxu0 0
  %142 = vmatpush1.bf16.msra.mxu0 0
  %143 = vmatprep.subr.bf16.mxu0 0
  %144 = vmatpush1.bf16.msra.mxu0 0
  %145 = vmatprep.subr.bf16.mxu0 0
  %146 = vmatpush1.bf16.msra.mxu0 0
  %147 = vmatprep.subr.bf16.mxu0 0
  %148 = vmatpush1.bf16.msra.mxu0 0
  %149 = vmatprep.subr.bf16.mxu0 0
  %150 = vmatpush1.bf16.msra.mxu0 0
  %151 = vmatprep.subr.bf16.mxu0 0
  %152 = vmatpush1.bf16.msra.mxu0 %v38
  %153 = vmatprep.subr.bf16.mxu0 0
  %154 = vmatpush1.bf16.msra.mxu0 %v37
  %155 = vmatprep.subr.bf16.mxu0 0
  %156 = vmatpush2.bf16.msra.mxu0 0
  %157 = vmatprep.subr.bf16.mxu0 0
  %158 = vmatpush2.bf16.msra.mxu0 0
  %159 = vmatprep.subr.bf16.mxu0 0
  %160 = vmatpush2.bf16.msra.mxu0 0
  %161 = vmatprep.subr.bf16.mxu0 0
  %162 = vmatpush2.bf16.msra.mxu0 0
  %163 = vmatprep.subr.bf16.mxu0 0
  %164 = vmatpush2.bf16.msra.mxu0 0
  %165 = vmatprep.subr.bf16.mxu0 0
  %166 = vmatpush2.bf16.msra.mxu0 0
  %167 = vmatprep.subr.bf16.mxu0 0
  %168 = vmatpush2.bf16.msra.mxu0 0
  %169 = vmatprep.subr.bf16.mxu0 0
  %170 = vmatpush2.bf16.msra.mxu0 0
  %171 = vmatprep.mubr.bf16.mxu0 0
  %172 = vmatmul.mubr.bf16.gmra.mxu0 %v137
  %v173 = vpop.f32.mrf.mxu0
  %v174 = vadd.f32 0.0, %v173
  %v175 = vpop.f32.mrf.mxu0
  %v176 = vpop.f32.mrf.mxu0
  %v177 = vpop.f32.mrf.mxu0
  %178 = vdwg.mxu0
  %v179 = vadd.f32 %v131, %v174
  %v180 = vxor.u32 %v179, 2147483648
  %v181 = vmul.f32 %v180, 1.442695
  %v182 = vpow.pop %v181
  %v183 = vadd.f32 %v182, 1.0
  %v184 = vrcp.pop %v183
  %v185 = vmul.f32 1.0, %v184
  %v186 = vadd.f32 %v174, %v98
  %188 = vrot.lane.b32.xlu0 %v186, 64
  %v189 = vpop.permute.xlu0 %188
  %v191 = vmul.f32 %v185, %v189
  %193 = vrot.lane.b32.xlu0 %v191, 64
  %v194 = vpop.permute.xlu0 %193
  %v196 = vadd.f32 %v131, %v194
  %v197 = vtanh.pop %v196
  %v198 = vsub.f32 1.0, %v185
  %200 = vrot.lane.b32.xlu0 %v197, 96
  %v201 = vpop.permute.xlu0 %200
  %v203 = vmul.f32 %v198, %v201
  %v204 = vmul.f32 %v185, %v123
  %v205 = vadd.f32 %v203, %v204
  %207 = vrot.lane.b32.xlu0 %v205, 96
  %v208 = vpop.permute.xlu0 %207
  %s210 = scalar_lea.vmem %s3, 2
  %211 = vst.msk [vmem:[%s210] sm:$0x3] %vm128, %v208
  %s212 = scalar_lea.vmem %s0, 4
  %v213 = vld [vmem:[%s212] sm:$0x3]
  %v214 = vpack.c.bf16 %v205, %v205
  %216 = vrot.lane.b32.xlu0 %v214, 96
  %v217 = vpop.permute.xlu0 %216
  %v219 = vsel %vm41, %v217, 0
  %221 = vmatprep.subr.bf16.mxu0 0
  %222 = vmatpush1.bf16.msra.mxu0 0
  %223 = vmatprep.subr.bf16.mxu0 0
  %224 = vmatpush1.bf16.msra.mxu0 0
  %225 = vmatprep.subr.bf16.mxu0 0
  %226 = vmatpush1.bf16.msra.mxu0 0
  %227 = vmatprep.subr.bf16.mxu0 0
  %228 = vmatpush1.bf16.msra.mxu0 0
  %229 = vmatprep.subr.bf16.mxu0 0
  %230 = vmatpush1.bf16.msra.mxu0 0
  %231 = vmatprep.subr.bf16.mxu0 0
  %232 = vmatpush1.bf16.msra.mxu0 0
  %233 = vmatprep.subr.bf16.mxu0 0
  %234 = vmatpush1.bf16.msra.mxu0 %v38
  %235 = vmatprep.subr.bf16.mxu0 0
  %236 = vmatpush1.bf16.msra.mxu0 %v37
  %237 = vmatprep.subr.bf16.mxu0 0
  %238 = vmatpush2.bf16.msra.mxu0 0
  %239 = vmatprep.subr.bf16.mxu0 0
  %240 = vmatpush2.bf16.msra.mxu0 0
  %241 = vmatprep.subr.bf16.mxu0 0
  %242 = vmatpush2.bf16.msra.mxu0 0
  %243 = vmatprep.subr.bf16.mxu0 0
  %244 = vmatpush2.bf16.msra.mxu0 0
  %245 = vmatprep.subr.bf16.mxu0 0
  %246 = vmatpush2.bf16.msra.mxu0 0
  %247 = vmatprep.subr.bf16.mxu0 0
  %248 = vmatpush2.bf16.msra.mxu0 0
  %249 = vmatprep.subr.bf16.mxu0 0
  %250 = vmatpush2.bf16.msra.mxu0 0
  %251 = vmatprep.subr.bf16.mxu0 0
  %252 = vmatpush2.bf16.msra.mxu0 0
  %253 = vmatprep.mubr.bf16.mxu0 0
  %254 = vmatmul.mubr.bf16.gmra.mxu0 %v219
  %v255 = vpop.f32.mrf.mxu0
  %v256 = vadd.f32 0.0, %v255
  %v257 = vpop.f32.mrf.mxu0
  %v258 = vpop.f32.mrf.mxu0
  %v259 = vpop.f32.mrf.mxu0
  %260 = vdwg.mxu0
  %v261 = vadd.f32 %v213, %v256
  %v262 = vxor.u32 %v261, 2147483648
  %v263 = vmul.f32 %v262, 1.442695
  %v264 = vpow.pop %v263
  %v265 = vadd.f32 %v264, 1.0
  %v266 = vrcp.pop %v265
  %v267 = vmul.f32 1.0, %v266
  %v268 = vadd.f32 %v256, %v98
  %270 = vrot.lane.b32.xlu0 %v268, 64
  %v271 = vpop.permute.xlu0 %270
  %v273 = vmul.f32 %v267, %v271
  %275 = vrot.lane.b32.xlu0 %v273, 64
  %v276 = vpop.permute.xlu0 %275
  %v278 = vadd.f32 %v213, %v276
  %v279 = vtanh.pop %v278
  %v280 = vsub.f32 1.0, %v267
  %282 = vrot.lane.b32.xlu0 %v279, 96
  %v283 = vpop.permute.xlu0 %282
  %v285 = vmul.f32 %v280, %v283
  %v286 = vmul.f32 %v267, %v205
  %v287 = vadd.f32 %v285, %v286
  %289 = vrot.lane.b32.xlu0 %v287, 96
  %v290 = vpop.permute.xlu0 %289
  %s292 = scalar_lea.vmem %s3, 4
  %293 = vst.msk [vmem:[%s292] sm:$0x3] %vm128, %v290
  %s294 = scalar_lea.vmem %s0, 6
  %v295 = vld [vmem:[%s294] sm:$0x3]
  %v296 = vpack.c.bf16 %v287, %v287
  %298 = vrot.lane.b32.xlu0 %v296, 96
  %v299 = vpop.permute.xlu0 %298
  %v301 = vsel %vm41, %v299, 0
  %303 = vmatprep.subr.bf16.mxu0 0
  %304 = vmatpush1.bf16.msra.mxu0 0
  %305 = vmatprep.subr.bf16.mxu0 0
  %306 = vmatpush1.bf16.msra.mxu0 0
  %307 = vmatprep.subr.bf16.mxu0 0
  %308 = vmatpush1.bf16.msra.mxu0 0
  %309 = vmatprep.subr.bf16.mxu0 0
  %310 = vmatpush1.bf16.msra.mxu0 0
  %311 = vmatprep.subr.bf16.mxu0 0
  %312 = vmatpush1.bf16.msra.mxu0 0
  %313 = vmatprep.subr.bf16.mxu0 0
  %314 = vmatpush1.bf16.msra.mxu0 0
  %315 = vmatprep.subr.bf16.mxu0 0
  %316 = vmatpush1.bf16.msra.mxu0 %v38
  %317 = vmatprep.subr.bf16.mxu0 0
  %318 = vmatpush1.bf16.msra.mxu0 %v37
  %319 = vmatprep.subr.bf16.mxu0 0
  %320 = vmatpush2.bf16.msra.mxu0 0
  %321 = vmatprep.subr.bf16.mxu0 0
  %322 = vmatpush2.bf16.msra.mxu0 0
  %323 = vmatprep.subr.bf16.mxu0 0
  %324 = vmatpush2.bf16.msra.mxu0 0
  %325 = vmatprep.subr.bf16.mxu0 0
  %326 = vmatpush2.bf16.msra.mxu0 0
  %327 = vmatprep.subr.bf16.mxu0 0
  %328 = vmatpush2.bf16.msra.mxu0 0
  %329 = vmatprep.subr.bf16.mxu0 0
  %330 = vmatpush2.bf16.msra.mxu0 0
  %331 = vmatprep.subr.bf16.mxu0 0
  %332 = vmatpush2.bf16.msra.mxu0 0
  %333 = vmatprep.subr.bf16.mxu0 0
  %334 = vmatpush2.bf16.msra.mxu0 0
  %335 = vmatprep.mubr.bf16.mxu0 0
  %336 = vmatmul.mubr.bf16.gmra.mxu0 %v301
  %v337 = vpop.f32.mrf.mxu0
  %v338 = vadd.f32 0.0, %v337
  %v339 = vpop.f32.mrf.mxu0
  %v340 = vpop.f32.mrf.mxu0
  %v341 = vpop.f32.mrf.mxu0
  %342 = vdwg.mxu0
  %v343 = vadd.f32 %v295, %v338
  %v344 = vxor.u32 %v343, 2147483648
  %v345 = vmul.f32 %v344, 1.442695
  %v346 = vpow.pop %v345
  %v347 = vadd.f32 %v346, 1.0
  %v348 = vrcp.pop %v347
  %v349 = vmul.f32 1.0, %v348
  %v350 = vadd.f32 %v338, %v98
  %352 = vrot.lane.b32.xlu0 %v350, 64
  %v353 = vpop.permute.xlu0 %352
  %v355 = vmul.f32 %v349, %v353
  %357 = vrot.lane.b32.xlu0 %v355, 64
  %v358 = vpop.permute.xlu0 %357
  %v360 = vadd.f32 %v295, %v358
  %v361 = vtanh.pop %v360
  %v362 = vsub.f32 1.0, %v349
  %364 = vrot.lane.b32.xlu0 %v361, 96
  %v365 = vpop.permute.xlu0 %364
  %v367 = vmul.f32 %v362, %v365
  %v368 = vmul.f32 %v349, %v287
  %v369 = vadd.f32 %v367, %v368
  %371 = vrot.lane.b32.xlu0 %v369, 96
  %v372 = vpop.permute.xlu0 %371
  %s374 = scalar_lea.vmem %s3, 6
  %375 = vst.msk [vmem:[%s374] sm:$0x3] %vm128, %v372
  %s376 = scalar_lea.vmem %s0, 8
  %v377 = vld [vmem:[%s376] sm:$0x3]
  %v378 = vpack.c.bf16 %v369, %v369
  %380 = vrot.lane.b32.xlu0 %v378, 96
  %v381 = vpop.permute.xlu0 %380
  %v383 = vsel %vm41, %v381, 0
  %385 = vmatprep.subr.bf16.mxu0 0
  %386 = vmatpush1.bf16.msra.mxu0 0
  %387 = vmatprep.subr.bf16.mxu0 0
  %388 = vmatpush1.bf16.msra.mxu0 0
  %389 = vmatprep.subr.bf16.mxu0 0
  %390 = vmatpush1.bf16.msra.mxu0 0
  %391 = vmatprep.subr.bf16.mxu0 0
  %392 = vmatpush1.bf16.msra.mxu0 0
  %393 = vmatprep.subr.bf16.mxu0 0
  %394 = vmatpush1.bf16.msra.mxu0 0
  %395 = vmatprep.subr.bf16.mxu0 0
  %396 = vmatpush1.bf16.msra.mxu0 0
  %397 = vmatprep.subr.bf16.mxu0 0
  %398 = vmatpush1.bf16.msra.mxu0 %v38
  %399 = vmatprep.subr.bf16.mxu0 0
  %400 = vmatpush1.bf16.msra.mxu0 %v37
  %401 = vmatprep.subr.bf16.mxu0 0
  %402 = vmatpush2.bf16.msra.mxu0 0
  %403 = vmatprep.subr.bf16.mxu0 0
  %404 = vmatpush2.bf16.msra.mxu0 0
  %405 = vmatprep.subr.bf16.mxu0 0
  %406 = vmatpush2.bf16.msra.mxu0 0
  %407 = vmatprep.subr.bf16.mxu0 0
  %408 = vmatpush2.bf16.msra.mxu0 0
  %409 = vmatprep.subr.bf16.mxu0 0
  %410 = vmatpush2.bf16.msra.mxu0 0
  %411 = vmatprep.subr.bf16.mxu0 0
  %412 = vmatpush2.bf16.msra.mxu0 0
  %413 = vmatprep.subr.bf16.mxu0 0
  %414 = vmatpush2.bf16.msra.mxu0 0
  %415 = vmatprep.subr.bf16.mxu0 0
  %416 = vmatpush2.bf16.msra.mxu0 0
  %417 = vmatprep.mubr.bf16.mxu0 0
  %418 = vmatmul.mubr.bf16.gmra.mxu0 %v383
  %v419 = vpop.f32.mrf.mxu0
  %v420 = vadd.f32 0.0, %v419
  %v421 = vpop.f32.mrf.mxu0
  %v422 = vpop.f32.mrf.mxu0
  %v423 = vpop.f32.mrf.mxu0
  %424 = vdwg.mxu0
  %v425 = vadd.f32 %v377, %v420
  %v426 = vxor.u32 %v425, 2147483648
  %v427 = vmul.f32 %v426, 1.442695
  %v428 = vpow.pop %v427
  %v429 = vadd.f32 %v428, 1.0
  %v430 = vrcp.pop %v429
  %v431 = vmul.f32 1.0, %v430
  %v432 = vadd.f32 %v420, %v98
  %434 = vrot.lane.b32.xlu0 %v432, 64
  %v435 = vpop.permute.xlu0 %434
  %v437 = vmul.f32 %v431, %v435
  %439 = vrot.lane.b32.xlu0 %v437, 64
  %v440 = vpop.permute.xlu0 %439
  %v442 = vadd.f32 %v377, %v440
  %v443 = vtanh.pop %v442
  %v444 = vsub.f32 1.0, %v431
  %446 = vrot.lane.b32.xlu0 %v443, 96
  %v447 = vpop.permute.xlu0 %446
  %v449 = vmul.f32 %v444, %v447
  %v450 = vmul.f32 %v431, %v369
  %v451 = vadd.f32 %v449, %v450
  %453 = vrot.lane.b32.xlu0 %v451, 96
  %v454 = vpop.permute.xlu0 %453
  %s456 = scalar_lea.vmem %s3, 8
  %457 = vst.msk [vmem:[%s456] sm:$0x3] %vm128, %v454
  %s458 = scalar_lea.vmem %s0, 10
  %v459 = vld [vmem:[%s458] sm:$0x3]
  %v460 = vpack.c.bf16 %v451, %v451
  %462 = vrot.lane.b32.xlu0 %v460, 96
  %v463 = vpop.permute.xlu0 %462
  %v465 = vsel %vm41, %v463, 0
  %467 = vmatprep.subr.bf16.mxu0 0
  %468 = vmatpush1.bf16.msra.mxu0 0
  %469 = vmatprep.subr.bf16.mxu0 0
  %470 = vmatpush1.bf16.msra.mxu0 0
  %471 = vmatprep.subr.bf16.mxu0 0
  %472 = vmatpush1.bf16.msra.mxu0 0
  %473 = vmatprep.subr.bf16.mxu0 0
  %474 = vmatpush1.bf16.msra.mxu0 0
  %475 = vmatprep.subr.bf16.mxu0 0
  %476 = vmatpush1.bf16.msra.mxu0 0
  %477 = vmatprep.subr.bf16.mxu0 0
  %478 = vmatpush1.bf16.msra.mxu0 0
  %479 = vmatprep.subr.bf16.mxu0 0
  %480 = vmatpush1.bf16.msra.mxu0 %v38
  %481 = vmatprep.subr.bf16.mxu0 0
  %482 = vmatpush1.bf16.msra.mxu0 %v37
  %483 = vmatprep.subr.bf16.mxu0 0
  %484 = vmatpush2.bf16.msra.mxu0 0
  %485 = vmatprep.subr.bf16.mxu0 0
  %486 = vmatpush2.bf16.msra.mxu0 0
  %487 = vmatprep.subr.bf16.mxu0 0
  %488 = vmatpush2.bf16.msra.mxu0 0
  %489 = vmatprep.subr.bf16.mxu0 0
  %490 = vmatpush2.bf16.msra.mxu0 0
  %491 = vmatprep.subr.bf16.mxu0 0
  %492 = vmatpush2.bf16.msra.mxu0 0
  %493 = vmatprep.subr.bf16.mxu0 0
  %494 = vmatpush2.bf16.msra.mxu0 0
  %495 = vmatprep.subr.bf16.mxu0 0
  %496 = vmatpush2.bf16.msra.mxu0 0
  %497 = vmatprep.subr.bf16.mxu0 0
  %498 = vmatpush2.bf16.msra.mxu0 0
  %499 = vmatprep.mubr.bf16.mxu0 0
  %500 = vmatmul.mubr.bf16.gmra.mxu0 %v465
  %v501 = vpop.f32.mrf.mxu0
  %v502 = vadd.f32 0.0, %v501
  %v503 = vpop.f32.mrf.mxu0
  %v504 = vpop.f32.mrf.mxu0
  %v505 = vpop.f32.mrf.mxu0
  %506 = vdwg.mxu0
  %v507 = vadd.f32 %v459, %v502
  %v508 = vxor.u32 %v507, 2147483648
  %v509 = vmul.f32 %v508, 1.442695
  %v510 = vpow.pop %v509
  %v511 = vadd.f32 %v510, 1.0
  %v512 = vrcp.pop %v511
  %v513 = vmul.f32 1.0, %v512
  %v514 = vadd.f32 %v502, %v98
  %516 = vrot.lane.b32.xlu0 %v514, 64
  %v517 = vpop.permute.xlu0 %516
  %v519 = vmul.f32 %v513, %v517
  %521 = vrot.lane.b32.xlu0 %v519, 64
  %v522 = vpop.permute.xlu0 %521
  %v524 = vadd.f32 %v459, %v522
  %v525 = vtanh.pop %v524
  %v526 = vsub.f32 1.0, %v513
  %528 = vrot.lane.b32.xlu0 %v525, 96
  %v529 = vpop.permute.xlu0 %528
  %v531 = vmul.f32 %v526, %v529
  %v532 = vmul.f32 %v513, %v451
  %v533 = vadd.f32 %v531, %v532
  %535 = vrot.lane.b32.xlu0 %v533, 96
  %v536 = vpop.permute.xlu0 %535
  %s538 = scalar_lea.vmem %s3, 10
  %539 = vst.msk [vmem:[%s538] sm:$0x3] %vm128, %v536
  %s540 = scalar_lea.vmem %s0, 12
  %v541 = vld [vmem:[%s540] sm:$0x3]
  %v542 = vpack.c.bf16 %v533, %v533
  %544 = vrot.lane.b32.xlu0 %v542, 96
  %v545 = vpop.permute.xlu0 %544
  %v547 = vsel %vm41, %v545, 0
  %549 = vmatprep.subr.bf16.mxu0 0
  %550 = vmatpush1.bf16.msra.mxu0 0
  %551 = vmatprep.subr.bf16.mxu0 0
  %552 = vmatpush1.bf16.msra.mxu0 0
  %553 = vmatprep.subr.bf16.mxu0 0
  %554 = vmatpush1.bf16.msra.mxu0 0
  %555 = vmatprep.subr.bf16.mxu0 0
  %556 = vmatpush1.bf16.msra.mxu0 0
  %557 = vmatprep.subr.bf16.mxu0 0
  %558 = vmatpush1.bf16.msra.mxu0 0
  %559 = vmatprep.subr.bf16.mxu0 0
  %560 = vmatpush1.bf16.msra.mxu0 0
  %561 = vmatprep.subr.bf16.mxu0 0
  %562 = vmatpush1.bf16.msra.mxu0 %v38
  %563 = vmatprep.subr.bf16.mxu0 0
  %564 = vmatpush1.bf16.msra.mxu0 %v37
  %565 = vmatprep.subr.bf16.mxu0 0
  %566 = vmatpush2.bf16.msra.mxu0 0
  %567 = vmatprep.subr.bf16.mxu0 0
  %568 = vmatpush2.bf16.msra.mxu0 0
  %569 = vmatprep.subr.bf16.mxu0 0
  %570 = vmatpush2.bf16.msra.mxu0 0
  %571 = vmatprep.subr.bf16.mxu0 0
  %572 = vmatpush2.bf16.msra.mxu0 0
  %573 = vmatprep.subr.bf16.mxu0 0
  %574 = vmatpush2.bf16.msra.mxu0 0
  %575 = vmatprep.subr.bf16.mxu0 0
  %576 = vmatpush2.bf16.msra.mxu0 0
  %577 = vmatprep.subr.bf16.mxu0 0
  %578 = vmatpush2.bf16.msra.mxu0 0
  %579 = vmatprep.subr.bf16.mxu0 0
  %580 = vmatpush2.bf16.msra.mxu0 0
  %581 = vmatprep.mubr.bf16.mxu0 0
  %582 = vmatmul.mubr.bf16.gmra.mxu0 %v547
  %v583 = vpop.f32.mrf.mxu0
  %v584 = vadd.f32 0.0, %v583
  %v585 = vpop.f32.mrf.mxu0
  %v586 = vpop.f32.mrf.mxu0
  %v587 = vpop.f32.mrf.mxu0
  %588 = vdwg.mxu0
  %v589 = vadd.f32 %v541, %v584
  %v590 = vxor.u32 %v589, 2147483648
  %v591 = vmul.f32 %v590, 1.442695
  %v592 = vpow.pop %v591
  %v593 = vadd.f32 %v592, 1.0
  %v594 = vrcp.pop %v593
  %v595 = vmul.f32 1.0, %v594
  %v596 = vadd.f32 %v584, %v98
  %598 = vrot.lane.b32.xlu0 %v596, 64
  %v599 = vpop.permute.xlu0 %598
  %v601 = vmul.f32 %v595, %v599
  %603 = vrot.lane.b32.xlu0 %v601, 64
  %v604 = vpop.permute.xlu0 %603
  %v606 = vadd.f32 %v541, %v604
  %v607 = vtanh.pop %v606
  %v608 = vsub.f32 1.0, %v595
  %610 = vrot.lane.b32.xlu0 %v607, 96
  %v611 = vpop.permute.xlu0 %610
  %v613 = vmul.f32 %v608, %v611
  %v614 = vmul.f32 %v595, %v533
  %v615 = vadd.f32 %v613, %v614
  %617 = vrot.lane.b32.xlu0 %v615, 96
  %v618 = vpop.permute.xlu0 %617
  %s620 = scalar_lea.vmem %s3, 12
  %621 = vst.msk [vmem:[%s620] sm:$0x3] %vm128, %v618
  %s622 = scalar_lea.vmem %s0, 14
  %v623 = vld [vmem:[%s622] sm:$0x3]
  %v624 = vpack.c.bf16 %v615, %v615
  %626 = vrot.lane.b32.xlu0 %v624, 96
  %v627 = vpop.permute.xlu0 %626
  %v629 = vsel %vm41, %v627, 0
  %631 = vmatprep.subr.bf16.mxu0 0
  %632 = vmatpush1.bf16.msra.mxu0 0
  %633 = vmatprep.subr.bf16.mxu0 0
  %634 = vmatpush1.bf16.msra.mxu0 0
  %635 = vmatprep.subr.bf16.mxu0 0
  %636 = vmatpush1.bf16.msra.mxu0 0
  %637 = vmatprep.subr.bf16.mxu0 0
  %638 = vmatpush1.bf16.msra.mxu0 0
  %639 = vmatprep.subr.bf16.mxu0 0
  %640 = vmatpush1.bf16.msra.mxu0 0
  %641 = vmatprep.subr.bf16.mxu0 0
  %642 = vmatpush1.bf16.msra.mxu0 0
  %643 = vmatprep.subr.bf16.mxu0 0
  %644 = vmatpush1.bf16.msra.mxu0 %v38
  %645 = vmatprep.subr.bf16.mxu0 0
  %646 = vmatpush1.bf16.msra.mxu0 %v37
  %647 = vmatprep.subr.bf16.mxu0 0
  %648 = vmatpush2.bf16.msra.mxu0 0
  %649 = vmatprep.subr.bf16.mxu0 0
  %650 = vmatpush2.bf16.msra.mxu0 0
  %651 = vmatprep.subr.bf16.mxu0 0
  %652 = vmatpush2.bf16.msra.mxu0 0
  %653 = vmatprep.subr.bf16.mxu0 0
  %654 = vmatpush2.bf16.msra.mxu0 0
  %655 = vmatprep.subr.bf16.mxu0 0
  %656 = vmatpush2.bf16.msra.mxu0 0
  %657 = vmatprep.subr.bf16.mxu0 0
  %658 = vmatpush2.bf16.msra.mxu0 0
  %659 = vmatprep.subr.bf16.mxu0 0
  %660 = vmatpush2.bf16.msra.mxu0 0
  %661 = vmatprep.subr.bf16.mxu0 0
  %662 = vmatpush2.bf16.msra.mxu0 0
  %663 = vmatprep.mubr.bf16.mxu0 0
  %664 = vmatmul.mubr.bf16.gmra.mxu0 %v629
  %v665 = vpop.f32.mrf.mxu0
  %v666 = vadd.f32 0.0, %v665
  %v667 = vpop.f32.mrf.mxu0
  %v668 = vpop.f32.mrf.mxu0
  %v669 = vpop.f32.mrf.mxu0
  %670 = vdwg.mxu0
  %v671 = vadd.f32 %v623, %v666
  %v672 = vxor.u32 %v671, 2147483648
  %v673 = vmul.f32 %v672, 1.442695
  %v674 = vpow.pop %v673
  %v675 = vadd.f32 %v674, 1.0
  %v676 = vrcp.pop %v675
  %v677 = vmul.f32 1.0, %v676
  %v678 = vadd.f32 %v666, %v98
  %680 = vrot.lane.b32.xlu0 %v678, 64
  %v681 = vpop.permute.xlu0 %680
  %v683 = vmul.f32 %v677, %v681
  %685 = vrot.lane.b32.xlu0 %v683, 64
  %v686 = vpop.permute.xlu0 %685
  %v688 = vadd.f32 %v623, %v686
  %v689 = vtanh.pop %v688
  %v690 = vsub.f32 1.0, %v677
  %692 = vrot.lane.b32.xlu0 %v689, 96
  %v693 = vpop.permute.xlu0 %692
  %v695 = vmul.f32 %v690, %v693
  %v696 = vmul.f32 %v677, %v615
  %v697 = vadd.f32 %v695, %v696
  %699 = vrot.lane.b32.xlu0 %v697, 96
  %v700 = vpop.permute.xlu0 %699
  %s702 = scalar_lea.vmem %s3, 14
  %703 = vst.msk [vmem:[%s702] sm:$0x3] %vm128, %v700
  %704 = vst.msk [vmem:[#allocation2] sm:$0x3] %vm128, %v700
  // Predicated region
  $region18: #{gru_rnn_forward.5} parent=0 // pred_check
    _
  $region19: #{gru_rnn_forward.5} parent=0 // pred_check_branch
    %706 = sbr.rel (0) target = $region21
  $region20: #{gru_rnn_forward.5} parent=0 // pred_region
    _
  $region21: #{gru_rnn_forward.5} parent=0 // pred_fallthru
    _
  // Predicated region
  $region22: #{gru_rnn_forward.5} parent=0 // pred_check
    _
  $region23: #{gru_rnn_forward.5} parent=0 // pred_check_branch
    %708 = sbr.rel (0) target = $region25
  $region24: #{gru_rnn_forward.5} parent=0 // pred_region
    _
  $region25: #{gru_rnn_forward.5} parent=0 // pred_fallthru
    _

</llo_original>
